<compile_context>
chip_gen: v5e
topology: v5e:2x2
jax: 0.10.0
libtpu: 0.0.40
codegen_flags: <defaults>
</compile_context>

<pallas_src>
import functools

import jax
import jax.numpy as jnp
from jax import lax
from jax.experimental import pallas as pl
from jax.experimental.pallas import tpu as pltpu


def _sa_kernel(wmask_ref, x_ref, o_ref, *, C, H, W, K):
    # wmask_ref: (K*K, HW) f32 masked-weight table (grid-invariant VMEM).
    # x_ref:     (Bn, C*HW) input block (spatial flattened onto lanes).
    # o_ref:     (Bn, HW)   output block.
    HW = H * W
    P = K // 2

    # Channel-wise max (torch.max(x, dim=1)) over static lane slices,
    # computed in the input dtype; cast only the reduced plane.
    m = x_ref[:, 0:HW]
    for c in range(1, C):
        m = jnp.maximum(m, x_ref[:, c * HW:(c + 1) * HW])
    m = m.astype(jnp.float32)                               # (Bn, HW)

    # KxK zero-padded cross-correlation (PyTorch Conv2d: no kernel flip).
    # shifted[p] == m[(p + dy*W + dx) mod HW]; circular wrap positions are
    # exactly the border-invalid ones and carry a zero in the wmask row.
    acc = jnp.zeros(m.shape, jnp.float32)
    for ky in range(K):
        dy = ky - P
        for kx in range(K):
            dx = kx - P
            s = dy * W + dx                                 # flattened offset
            if s == 0:
                shifted = m
            else:
                shifted = pltpu.roll(m, shift=(-s) % HW, axis=1)
            tap = ky * K + kx
            w_row = wmask_ref[tap:tap + 1, :]               # (1, HW) broadcast
            acc = acc + shifted * w_row
    o_ref[...] = acc.astype(o_ref.dtype)


def _build_masked_weights(weight, H, W):
    """(K*K, HW) f32 table: weight[ky,kx] * border-validity at each position."""
    K = weight.shape[0]
    P = K // 2
    HW = H * W
    flat = jnp.arange(HW)
    row = flat // W
    col = flat % W
    rows = []
    for ky in range(K):
        dy = ky - P
        for kx in range(K):
            dx = kx - P
            valid = ((row + dy >= 0) & (row + dy < H)
                     & (col + dx >= 0) & (col + dx < W))
            rows.append(jnp.where(valid, weight[ky, kx].astype(jnp.float32),
                                  jnp.float32(0.0)))
    return jnp.stack(rows, axis=0)                          # (K*K, HW)


def _target_block_bytes():
    # Chip-aware input-block target: smaller on 64-MiB-VMEM chips (v7x-class),
    # larger on 128-MiB-VMEM chips (v5e / v6e).
    try:
        info = pltpu.get_tpu_info()
        vmem = getattr(info, "vmem_capacity_bytes", None)
        if isinstance(vmem, int) and 0 < vmem <= (64 << 20):
            return 2 << 20
    except Exception:
        pass
    return 4 << 20


def _num_tensorcores():
    try:
        info = pltpu.get_tpu_info()
        for name in ("num_cores", "tensorcore_count", "num_tensorcores",
                     "cores_per_chip"):
            v = getattr(info, name, None)
            if isinstance(v, int) and v > 0:
                return v
    except Exception:
        pass
    return 1


def _pick_block_n(N, C, HW, itemsize, K):
    """Batch rows per grid step: >=8 (fill sublanes), multiple of 8 or == N."""
    target = _target_block_bytes()
    num_cores = _num_tensorcores()
    per_row = max(1, C * HW * itemsize)
    bn = min(N, max(1, target // per_row))
    if bn >= 8:
        bn -= bn % 8
    bn = max(bn, min(N, 8))                 # sublane-occupancy floor
    # Only when >1 TensorCore: make sure each core gets at least one step.
    while bn > 8 and num_cores > 1 and pl.cdiv(N, bn) < num_cores:
        bn -= 8

    # Keep double-buffered input + output + wmask + f32 temporaries in budget.
    def vmem_need(b):
        return (2 * b * C * HW * itemsize   # input (double-buffered)
                + 2 * b * HW * itemsize     # output (double-buffered)
                + 2 * K * K * HW * 4        # masked-weight table
                + 2 * b * HW * 4)           # m / acc f32 temporaries

    while bn > 8 and vmem_need(bn) > (40 << 20):
        bn -= 8
    return bn


def spatial_attention_no_s(x, weight, *, block_n=None):
    """x: (N, C, H, W); weight: (K, K)  ->  (N, 1, H, W)."""
    N, C, H, W = x.shape
    K = weight.shape[0]
    HW = H * W

    # Lane-dense presentation: channels*spatial flattened onto the lane axis.
    x2 = x.reshape(N, C * HW)
    wmask = _build_masked_weights(weight, H, W)             # (K*K, HW) f32

    if block_n is None:
        block_n = _pick_block_n(N, C, HW, x.dtype.itemsize, K)
    grid = (pl.cdiv(N, block_n),)                           # ragged last block OK

    kernel = functools.partial(_sa_kernel, C=C, H=H, W=W, K=K)

    flops = (C - 1) * N * HW + 2 * K * K * N * HW
    bytes_accessed = (N * C * HW + N * HW) * x.dtype.itemsize + K * K * HW * 4

    est_vmem = (2 * block_n * C * HW * x.dtype.itemsize
                + 2 * block_n * HW * x.dtype.itemsize
                + 2 * K * K * HW * 4
                + 2 * block_n * HW * 4)
    vmem_limit = None
    if est_vmem > (12 << 20):
        vmem_limit = int(min(2 * est_vmem, 48 << 20))

    out = pl.pallas_call(
        kernel,
        out_shape=jax.ShapeDtypeStruct((N, HW), x.dtype),
        grid_spec=pltpu.PrefetchScalarGridSpec(
            num_scalar_prefetch=0,
            grid=grid,
            in_specs=[
                # Grid-invariant masked-weight table (stays resident in VMEM).
                pl.BlockSpec((K * K, HW), lambda n: (0, 0)),
                pl.BlockSpec((block_n, C * HW), lambda n: (n, 0)),
            ],
            out_specs=pl.BlockSpec((block_n, HW), lambda n: (n, 0)),
        ),
        compiler_params=pltpu.CompilerParams(
            dimension_semantics=("parallel",),
            vmem_limit_bytes=vmem_limit),
        cost_estimate=pl.CostEstimate(
            flops=flops, transcendentals=0, bytes_accessed=bytes_accessed),
    )(wmask, x2)

    return out.reshape(N, 1, H, W)


def _reference(x, weight):
    # Pure-JAX reference: channel max + KxK cross-correlation, zero padding K//2.
    K = weight.shape[0]
    P = K // 2
    m = jnp.max(x, axis=1, keepdims=True)                   # (N, 1, H, W)
    w = weight[jnp.newaxis, jnp.newaxis]                    # (O=1, I=1, K, K)
    return lax.conv_general_dilated(
        m, w, window_strides=(1, 1), padding=((P, P), (P, P)),
        dimension_numbers=("NCHW", "OIHW", "NCHW"))


if __name__ == "__main__":
    key = jax.random.PRNGKey(0)
    k_x, k_w = jax.random.split(key)

    N, C, H, W = 2, 4, 16, 16
    K = 7

    x = jax.random.normal(k_x, (N, C, H, W), dtype=jnp.float32)

    # Deterministic Conv2d(1, 1, 7, bias=False)-style weight
    # (kaiming-uniform-like): bound = 1/sqrt(fan_in), fan_in = 1 * 7 * 7.
    bound = 1.0 / jnp.sqrt(jnp.float32(K * K))
    weight = jax.random.uniform(k_w, (K, K), dtype=jnp.float32,
                                minval=-bound, maxval=bound)

    out = spatial_attention_no_s(x, weight)
    out = jax.block_until_ready(out)

    ref = _reference(x, weight)
    assert out.shape == (N, 1, H, W)
    assert jnp.allclose(out, ref, atol=1e-5, rtol=1e-5)

    print("KERNEL_OK")
</pallas_src>

<mosaic_0001>
module attributes {stable_mosaic.version = 11 : i64} {
  func.func @_sa_kernel(%arg0: i32, %arg1: memref<49x256xf32, #tpu.memory_space<vmem>>, %arg2: memref<2x1024xf32, #tpu.memory_space<vmem>>, %arg3: memref<2x256xf32, #tpu.memory_space<vmem>>) attributes {dimension_semantics = [#tpu.dimension_semantics<parallel>], iteration_bounds = array<i64: 1>, scalar_prefetch = 0 : i64, scratch_operands = 0 : i64, tpu.core_type = #tpu.core_type<tc>, window_params = [{pipeline_mode = #tpu.pipeline_mode<synchronous>, transform_indices = @transform_0, window_bounds = array<i64: 49, 256>}, {transform_indices = @transform_1, window_bounds = array<i64: 2, 1024>}, {transform_indices = @transform_2, window_bounds = array<i64: 2, 256>}]} {
    %c0 = arith.constant 0 : index
    %c0_0 = arith.constant 0 : index
    %0 = vector.load %arg2[%c0, %c0_0] : memref<2x1024xf32, #tpu.memory_space<vmem>>, vector<2x256xf32>
    %c0_1 = arith.constant 0 : index
    %c256 = arith.constant 256 : index
    %1 = vector.load %arg2[%c0_1, %c256] : memref<2x1024xf32, #tpu.memory_space<vmem>>, vector<2x256xf32>
    %2 = arith.maximumf %0, %1 : vector<2x256xf32>
    %c0_2 = arith.constant 0 : index
    %c512 = arith.constant 512 : index
    %3 = vector.load %arg2[%c0_2, %c512] : memref<2x1024xf32, #tpu.memory_space<vmem>>, vector<2x256xf32>
    %4 = arith.maximumf %2, %3 : vector<2x256xf32>
    %c0_3 = arith.constant 0 : index
    %c768 = arith.constant 768 : index
    %5 = vector.load %arg2[%c0_3, %c768] : memref<2x1024xf32, #tpu.memory_space<vmem>>, vector<2x256xf32>
    %6 = arith.maximumf %4, %5 : vector<2x256xf32>
    %cst = arith.constant 0.000000e+00 : f32
    %7 = vector.broadcast %cst : f32 to vector<2x256xf32>
    %c51_i32 = arith.constant 51 : i32
    %8 = tpu.dynamic_rotate %6 by %c51_i32 dim 1 : vector<2x256xf32>, i32 -> vector<2x256xf32>
    %c0_4 = arith.constant 0 : index
    %c0_5 = arith.constant 0 : index
    %9 = vector.load %arg1[%c0_4, %c0_5] : memref<49x256xf32, #tpu.memory_space<vmem>>, vector<1x256xf32>
    %10 = vector.broadcast %9 : vector<1x256xf32> to vector<2x256xf32>
    %11 = arith.mulf %8, %10 : vector<2x256xf32>
    %12 = arith.addf %7, %11 : vector<2x256xf32>
    %c50_i32 = arith.constant 50 : i32
    %13 = tpu.dynamic_rotate %6 by %c50_i32 dim 1 : vector<2x256xf32>, i32 -> vector<2x256xf32>
    %c1 = arith.constant 1 : index
    %c0_6 = arith.constant 0 : index
    %14 = vector.load %arg1[%c1, %c0_6] : memref<49x256xf32, #tpu.memory_space<vmem>>, vector<1x256xf32>
    %15 = vector.broadcast %14 : vector<1x256xf32> to vector<2x256xf32>
    %16 = arith.mulf %13, %15 : vector<2x256xf32>
    %17 = arith.addf %12, %16 : vector<2x256xf32>
    %c49_i32 = arith.constant 49 : i32
    %18 = tpu.dynamic_rotate %6 by %c49_i32 dim 1 : vector<2x256xf32>, i32 -> vector<2x256xf32>
    %c2 = arith.constant 2 : index
    %c0_7 = arith.constant 0 : index
    %19 = vector.load %arg1[%c2, %c0_7] : memref<49x256xf32, #tpu.memory_space<vmem>>, vector<1x256xf32>
    %20 = vector.broadcast %19 : vector<1x256xf32> to vector<2x256xf32>
    %21 = arith.mulf %18, %20 : vector<2x256xf32>
    %22 = arith.addf %17, %21 : vector<2x256xf32>
    %c48_i32 = arith.constant 48 : i32
    %23 = tpu.dynamic_rotate %6 by %c48_i32 dim 1 : vector<2x256xf32>, i32 -> vector<2x256xf32>
    %c3 = arith.constant 3 : index
    %c0_8 = arith.constant 0 : index
    %24 = vector.load %arg1[%c3, %c0_8] : memref<49x256xf32, #tpu.memory_space<vmem>>, vector<1x256xf32>
    %25 = vector.broadcast %24 : vector<1x256xf32> to vector<2x256xf32>
    %26 = arith.mulf %23, %25 : vector<2x256xf32>
    %27 = arith.addf %22, %26 : vector<2x256xf32>
    %c47_i32 = arith.constant 47 : i32
    %28 = tpu.dynamic_rotate %6 by %c47_i32 dim 1 : vector<2x256xf32>, i32 -> vector<2x256xf32>
    %c4 = arith.constant 4 : index
    %c0_9 = arith.constant 0 : index
    %29 = vector.load %arg1[%c4, %c0_9] : memref<49x256xf32, #tpu.memory_space<vmem>>, vector<1x256xf32>
    %30 = vector.broadcast %29 : vector<1x256xf32> to vector<2x256xf32>
    %31 = arith.mulf %28, %30 : vector<2x256xf32>
    %32 = arith.addf %27, %31 : vector<2x256xf32>
    %c46_i32 = arith.constant 46 : i32
    %33 = tpu.dynamic_rotate %6 by %c46_i32 dim 1 : vector<2x256xf32>, i32 -> vector<2x256xf32>
    %c5 = arith.constant 5 : index
    %c0_10 = arith.constant 0 : index
    %34 = vector.load %arg1[%c5, %c0_10] : memref<49x256xf32, #tpu.memory_space<vmem>>, vector<1x256xf32>
    %35 = vector.broadcast %34 : vector<1x256xf32> to vector<2x256xf32>
    %36 = arith.mulf %33, %35 : vector<2x256xf32>
    %37 = arith.addf %32, %36 : vector<2x256xf32>
    %c45_i32 = arith.constant 45 : i32
    %38 = tpu.dynamic_rotate %6 by %c45_i32 dim 1 : vector<2x256xf32>, i32 -> vector<2x256xf32>
    %c6 = arith.constant 6 : index
    %c0_11 = arith.constant 0 : index
    %39 = vector.load %arg1[%c6, %c0_11] : memref<49x256xf32, #tpu.memory_space<vmem>>, vector<1x256xf32>
    %40 = vector.broadcast %39 : vector<1x256xf32> to vector<2x256xf32>
    %41 = arith.mulf %38, %40 : vector<2x256xf32>
    %42 = arith.addf %37, %41 : vector<2x256xf32>
    %c35_i32 = arith.constant 35 : i32
    %43 = tpu.dynamic_rotate %6 by %c35_i32 dim 1 : vector<2x256xf32>, i32 -> vector<2x256xf32>
    %c7 = arith.constant 7 : index
    %c0_12 = arith.constant 0 : index
    %44 = vector.load %arg1[%c7, %c0_12] : memref<49x256xf32, #tpu.memory_space<vmem>>, vector<1x256xf32>
    %45 = vector.broadcast %44 : vector<1x256xf32> to vector<2x256xf32>
    %46 = arith.mulf %43, %45 : vector<2x256xf32>
    %47 = arith.addf %42, %46 : vector<2x256xf32>
    %c34_i32 = arith.constant 34 : i32
    %48 = tpu.dynamic_rotate %6 by %c34_i32 dim 1 : vector<2x256xf32>, i32 -> vector<2x256xf32>
    %c8 = arith.constant 8 : index
    %c0_13 = arith.constant 0 : index
    %49 = vector.load %arg1[%c8, %c0_13] : memref<49x256xf32, #tpu.memory_space<vmem>>, vector<1x256xf32>
    %50 = vector.broadcast %49 : vector<1x256xf32> to vector<2x256xf32>
    %51 = arith.mulf %48, %50 : vector<2x256xf32>
    %52 = arith.addf %47, %51 : vector<2x256xf32>
    %c33_i32 = arith.constant 33 : i32
    %53 = tpu.dynamic_rotate %6 by %c33_i32 dim 1 : vector<2x256xf32>, i32 -> vector<2x256xf32>
    %c9 = arith.constant 9 : index
    %c0_14 = arith.constant 0 : index
    %54 = vector.load %arg1[%c9, %c0_14] : memref<49x256xf32, #tpu.memory_space<vmem>>, vector<1x256xf32>
    %55 = vector.broadcast %54 : vector<1x256xf32> to vector<2x256xf32>
    %56 = arith.mulf %53, %55 : vector<2x256xf32>
    %57 = arith.addf %52, %56 : vector<2x256xf32>
    %c32_i32 = arith.constant 32 : i32
    %58 = tpu.dynamic_rotate %6 by %c32_i32 dim 1 : vector<2x256xf32>, i32 -> vector<2x256xf32>
    %c10 = arith.constant 10 : index
    %c0_15 = arith.constant 0 : index
    %59 = vector.load %arg1[%c10, %c0_15] : memref<49x256xf32, #tpu.memory_space<vmem>>, vector<1x256xf32>
    %60 = vector.broadcast %59 : vector<1x256xf32> to vector<2x256xf32>
    %61 = arith.mulf %58, %60 : vector<2x256xf32>
    %62 = arith.addf %57, %61 : vector<2x256xf32>
    %c31_i32 = arith.constant 31 : i32
    %63 = tpu.dynamic_rotate %6 by %c31_i32 dim 1 : vector<2x256xf32>, i32 -> vector<2x256xf32>
    %c11 = arith.constant 11 : index
    %c0_16 = arith.constant 0 : index
    %64 = vector.load %arg1[%c11, %c0_16] : memref<49x256xf32, #tpu.memory_space<vmem>>, vector<1x256xf32>
    %65 = vector.broadcast %64 : vector<1x256xf32> to vector<2x256xf32>
    %66 = arith.mulf %63, %65 : vector<2x256xf32>
    %67 = arith.addf %62, %66 : vector<2x256xf32>
    %c30_i32 = arith.constant 30 : i32
    %68 = tpu.dynamic_rotate %6 by %c30_i32 dim 1 : vector<2x256xf32>, i32 -> vector<2x256xf32>
    %c12 = arith.constant 12 : index
    %c0_17 = arith.constant 0 : index
    %69 = vector.load %arg1[%c12, %c0_17] : memref<49x256xf32, #tpu.memory_space<vmem>>, vector<1x256xf32>
    %70 = vector.broadcast %69 : vector<1x256xf32> to vector<2x256xf32>
    %71 = arith.mulf %68, %70 : vector<2x256xf32>
    %72 = arith.addf %67, %71 : vector<2x256xf32>
    %c29_i32 = arith.constant 29 : i32
    %73 = tpu.dynamic_rotate %6 by %c29_i32 dim 1 : vector<2x256xf32>, i32 -> vector<2x256xf32>
    %c13 = arith.constant 13 : index
    %c0_18 = arith.constant 0 : index
    %74 = vector.load %arg1[%c13, %c0_18] : memref<49x256xf32, #tpu.memory_space<vmem>>, vector<1x256xf32>
    %75 = vector.broadcast %74 : vector<1x256xf32> to vector<2x256xf32>
    %76 = arith.mulf %73, %75 : vector<2x256xf32>
    %77 = arith.addf %72, %76 : vector<2x256xf32>
    %c19_i32 = arith.constant 19 : i32
    %78 = tpu.dynamic_rotate %6 by %c19_i32 dim 1 : vector<2x256xf32>, i32 -> vector<2x256xf32>
    %c14 = arith.constant 14 : index
    %c0_19 = arith.constant 0 : index
    %79 = vector.load %arg1[%c14, %c0_19] : memref<49x256xf32, #tpu.memory_space<vmem>>, vector<1x256xf32>
    %80 = vector.broadcast %79 : vector<1x256xf32> to vector<2x256xf32>
    %81 = arith.mulf %78, %80 : vector<2x256xf32>
    %82 = arith.addf %77, %81 : vector<2x256xf32>
    %c18_i32 = arith.constant 18 : i32
    %83 = tpu.dynamic_rotate %6 by %c18_i32 dim 1 : vector<2x256xf32>, i32 -> vector<2x256xf32>
    %c15 = arith.constant 15 : index
    %c0_20 = arith.constant 0 : index
    %84 = vector.load %arg1[%c15, %c0_20] : memref<49x256xf32, #tpu.memory_space<vmem>>, vector<1x256xf32>
    %85 = vector.broadcast %84 : vector<1x256xf32> to vector<2x256xf32>
    %86 = arith.mulf %83, %85 : vector<2x256xf32>
    %87 = arith.addf %82, %86 : vector<2x256xf32>
    %c17_i32 = arith.constant 17 : i32
    %88 = tpu.dynamic_rotate %6 by %c17_i32 dim 1 : vector<2x256xf32>, i32 -> vector<2x256xf32>
    %c16 = arith.constant 16 : index
    %c0_21 = arith.constant 0 : index
    %89 = vector.load %arg1[%c16, %c0_21] : memref<49x256xf32, #tpu.memory_space<vmem>>, vector<1x256xf32>
    %90 = vector.broadcast %89 : vector<1x256xf32> to vector<2x256xf32>
    %91 = arith.mulf %88, %90 : vector<2x256xf32>
    %92 = arith.addf %87, %91 : vector<2x256xf32>
    %c16_i32 = arith.constant 16 : i32
    %93 = tpu.dynamic_rotate %6 by %c16_i32 dim 1 : vector<2x256xf32>, i32 -> vector<2x256xf32>
    %c17 = arith.constant 17 : index
    %c0_22 = arith.constant 0 : index
    %94 = vector.load %arg1[%c17, %c0_22] : memref<49x256xf32, #tpu.memory_space<vmem>>, vector<1x256xf32>
    %95 = vector.broadcast %94 : vector<1x256xf32> to vector<2x256xf32>
    %96 = arith.mulf %93, %95 : vector<2x256xf32>
    %97 = arith.addf %92, %96 : vector<2x256xf32>
    %c15_i32 = arith.constant 15 : i32
    %98 = tpu.dynamic_rotate %6 by %c15_i32 dim 1 : vector<2x256xf32>, i32 -> vector<2x256xf32>
    %c18 = arith.constant 18 : index
    %c0_23 = arith.constant 0 : index
    %99 = vector.load %arg1[%c18, %c0_23] : memref<49x256xf32, #tpu.memory_space<vmem>>, vector<1x256xf32>
    %100 = vector.broadcast %99 : vector<1x256xf32> to vector<2x256xf32>
    %101 = arith.mulf %98, %100 : vector<2x256xf32>
    %102 = arith.addf %97, %101 : vector<2x256xf32>
    %c14_i32 = arith.constant 14 : i32
    %103 = tpu.dynamic_rotate %6 by %c14_i32 dim 1 : vector<2x256xf32>, i32 -> vector<2x256xf32>
    %c19 = arith.constant 19 : index
    %c0_24 = arith.constant 0 : index
    %104 = vector.load %arg1[%c19, %c0_24] : memref<49x256xf32, #tpu.memory_space<vmem>>, vector<1x256xf32>
    %105 = vector.broadcast %104 : vector<1x256xf32> to vector<2x256xf32>
    %106 = arith.mulf %103, %105 : vector<2x256xf32>
    %107 = arith.addf %102, %106 : vector<2x256xf32>
    %c13_i32 = arith.constant 13 : i32
    %108 = tpu.dynamic_rotate %6 by %c13_i32 dim 1 : vector<2x256xf32>, i32 -> vector<2x256xf32>
    %c20 = arith.constant 20 : index
    %c0_25 = arith.constant 0 : index
    %109 = vector.load %arg1[%c20, %c0_25] : memref<49x256xf32, #tpu.memory_space<vmem>>, vector<1x256xf32>
    %110 = vector.broadcast %109 : vector<1x256xf32> to vector<2x256xf32>
    %111 = arith.mulf %108, %110 : vector<2x256xf32>
    %112 = arith.addf %107, %111 : vector<2x256xf32>
    %c3_i32 = arith.constant 3 : i32
    %113 = tpu.dynamic_rotate %6 by %c3_i32 dim 1 : vector<2x256xf32>, i32 -> vector<2x256xf32>
    %c21 = arith.constant 21 : index
    %c0_26 = arith.constant 0 : index
    %114 = vector.load %arg1[%c21, %c0_26] : memref<49x256xf32, #tpu.memory_space<vmem>>, vector<1x256xf32>
    %115 = vector.broadcast %114 : vector<1x256xf32> to vector<2x256xf32>
    %116 = arith.mulf %113, %115 : vector<2x256xf32>
    %117 = arith.addf %112, %116 : vector<2x256xf32>
    %c2_i32 = arith.constant 2 : i32
    %118 = tpu.dynamic_rotate %6 by %c2_i32 dim 1 : vector<2x256xf32>, i32 -> vector<2x256xf32>
    %c22 = arith.constant 22 : index
    %c0_27 = arith.constant 0 : index
    %119 = vector.load %arg1[%c22, %c0_27] : memref<49x256xf32, #tpu.memory_space<vmem>>, vector<1x256xf32>
    %120 = vector.broadcast %119 : vector<1x256xf32> to vector<2x256xf32>
    %121 = arith.mulf %118, %120 : vector<2x256xf32>
    %122 = arith.addf %117, %121 : vector<2x256xf32>
    %c1_i32 = arith.constant 1 : i32
    %123 = tpu.dynamic_rotate %6 by %c1_i32 dim 1 : vector<2x256xf32>, i32 -> vector<2x256xf32>
    %c23 = arith.constant 23 : index
    %c0_28 = arith.constant 0 : index
    %124 = vector.load %arg1[%c23, %c0_28] : memref<49x256xf32, #tpu.memory_space<vmem>>, vector<1x256xf32>
    %125 = vector.broadcast %124 : vector<1x256xf32> to vector<2x256xf32>
    %126 = arith.mulf %123, %125 : vector<2x256xf32>
    %127 = arith.addf %122, %126 : vector<2x256xf32>
    %c24 = arith.constant 24 : index
    %c0_29 = arith.constant 0 : index
    %128 = vector.load %arg1[%c24, %c0_29] : memref<49x256xf32, #tpu.memory_space<vmem>>, vector<1x256xf32>
    %129 = vector.broadcast %128 : vector<1x256xf32> to vector<2x256xf32>
    %130 = arith.mulf %6, %129 : vector<2x256xf32>
    %131 = arith.addf %127, %130 : vector<2x256xf32>
    %c255_i32 = arith.constant 255 : i32
    %132 = tpu.dynamic_rotate %6 by %c255_i32 dim 1 : vector<2x256xf32>, i32 -> vector<2x256xf32>
    %c25 = arith.constant 25 : index
    %c0_30 = arith.constant 0 : index
    %133 = vector.load %arg1[%c25, %c0_30] : memref<49x256xf32, #tpu.memory_space<vmem>>, vector<1x256xf32>
    %134 = vector.broadcast %133 : vector<1x256xf32> to vector<2x256xf32>
    %135 = arith.mulf %132, %134 : vector<2x256xf32>
    %136 = arith.addf %131, %135 : vector<2x256xf32>
    %c254_i32 = arith.constant 254 : i32
    %137 = tpu.dynamic_rotate %6 by %c254_i32 dim 1 : vector<2x256xf32>, i32 -> vector<2x256xf32>
    %c26 = arith.constant 26 : index
    %c0_31 = arith.constant 0 : index
    %138 = vector.load %arg1[%c26, %c0_31] : memref<49x256xf32, #tpu.memory_space<vmem>>, vector<1x256xf32>
    %139 = vector.broadcast %138 : vector<1x256xf32> to vector<2x256xf32>
    %140 = arith.mulf %137, %139 : vector<2x256xf32>
    %141 = arith.addf %136, %140 : vector<2x256xf32>
    %c253_i32 = arith.constant 253 : i32
    %142 = tpu.dynamic_rotate %6 by %c253_i32 dim 1 : vector<2x256xf32>, i32 -> vector<2x256xf32>
    %c27 = arith.constant 27 : index
    %c0_32 = arith.constant 0 : index
    %143 = vector.load %arg1[%c27, %c0_32] : memref<49x256xf32, #tpu.memory_space<vmem>>, vector<1x256xf32>
    %144 = vector.broadcast %143 : vector<1x256xf32> to vector<2x256xf32>
    %145 = arith.mulf %142, %144 : vector<2x256xf32>
    %146 = arith.addf %141, %145 : vector<2x256xf32>
    %c243_i32 = arith.constant 243 : i32
    %147 = tpu.dynamic_rotate %6 by %c243_i32 dim 1 : vector<2x256xf32>, i32 -> vector<2x256xf32>
    %c28 = arith.constant 28 : index
    %c0_33 = arith.constant 0 : index
    %148 = vector.load %arg1[%c28, %c0_33] : memref<49x256xf32, #tpu.memory_space<vmem>>, vector<1x256xf32>
    %149 = vector.broadcast %148 : vector<1x256xf32> to vector<2x256xf32>
    %150 = arith.mulf %147, %149 : vector<2x256xf32>
    %151 = arith.addf %146, %150 : vector<2x256xf32>
    %c242_i32 = arith.constant 242 : i32
    %152 = tpu.dynamic_rotate %6 by %c242_i32 dim 1 : vector<2x256xf32>, i32 -> vector<2x256xf32>
    %c29 = arith.constant 29 : index
    %c0_34 = arith.constant 0 : index
    %153 = vector.load %arg1[%c29, %c0_34] : memref<49x256xf32, #tpu.memory_space<vmem>>, vector<1x256xf32>
    %154 = vector.broadcast %153 : vector<1x256xf32> to vector<2x256xf32>
    %155 = arith.mulf %152, %154 : vector<2x256xf32>
    %156 = arith.addf %151, %155 : vector<2x256xf32>
    %c241_i32 = arith.constant 241 : i32
    %157 = tpu.dynamic_rotate %6 by %c241_i32 dim 1 : vector<2x256xf32>, i32 -> vector<2x256xf32>
    %c30 = arith.constant 30 : index
    %c0_35 = arith.constant 0 : index
    %158 = vector.load %arg1[%c30, %c0_35] : memref<49x256xf32, #tpu.memory_space<vmem>>, vector<1x256xf32>
    %159 = vector.broadcast %158 : vector<1x256xf32> to vector<2x256xf32>
    %160 = arith.mulf %157, %159 : vector<2x256xf32>
    %161 = arith.addf %156, %160 : vector<2x256xf32>
    %c240_i32 = arith.constant 240 : i32
    %162 = tpu.dynamic_rotate %6 by %c240_i32 dim 1 : vector<2x256xf32>, i32 -> vector<2x256xf32>
    %c31 = arith.constant 31 : index
    %c0_36 = arith.constant 0 : index
    %163 = vector.load %arg1[%c31, %c0_36] : memref<49x256xf32, #tpu.memory_space<vmem>>, vector<1x256xf32>
    %164 = vector.broadcast %163 : vector<1x256xf32> to vector<2x256xf32>
    %165 = arith.mulf %162, %164 : vector<2x256xf32>
    %166 = arith.addf %161, %165 : vector<2x256xf32>
    %c239_i32 = arith.constant 239 : i32
    %167 = tpu.dynamic_rotate %6 by %c239_i32 dim 1 : vector<2x256xf32>, i32 -> vector<2x256xf32>
    %c32 = arith.constant 32 : index
    %c0_37 = arith.constant 0 : index
    %168 = vector.load %arg1[%c32, %c0_37] : memref<49x256xf32, #tpu.memory_space<vmem>>, vector<1x256xf32>
    %169 = vector.broadcast %168 : vector<1x256xf32> to vector<2x256xf32>
    %170 = arith.mulf %167, %169 : vector<2x256xf32>
    %171 = arith.addf %166, %170 : vector<2x256xf32>
    %c238_i32 = arith.constant 238 : i32
    %172 = tpu.dynamic_rotate %6 by %c238_i32 dim 1 : vector<2x256xf32>, i32 -> vector<2x256xf32>
    %c33 = arith.constant 33 : index
    %c0_38 = arith.constant 0 : index
    %173 = vector.load %arg1[%c33, %c0_38] : memref<49x256xf32, #tpu.memory_space<vmem>>, vector<1x256xf32>
    %174 = vector.broadcast %173 : vector<1x256xf32> to vector<2x256xf32>
    %175 = arith.mulf %172, %174 : vector<2x256xf32>
    %176 = arith.addf %171, %175 : vector<2x256xf32>
    %c237_i32 = arith.constant 237 : i32
    %177 = tpu.dynamic_rotate %6 by %c237_i32 dim 1 : vector<2x256xf32>, i32 -> vector<2x256xf32>
    %c34 = arith.constant 34 : index
    %c0_39 = arith.constant 0 : index
    %178 = vector.load %arg1[%c34, %c0_39] : memref<49x256xf32, #tpu.memory_space<vmem>>, vector<1x256xf32>
    %179 = vector.broadcast %178 : vector<1x256xf32> to vector<2x256xf32>
    %180 = arith.mulf %177, %179 : vector<2x256xf32>
    %181 = arith.addf %176, %180 : vector<2x256xf32>
    %c227_i32 = arith.constant 227 : i32
    %182 = tpu.dynamic_rotate %6 by %c227_i32 dim 1 : vector<2x256xf32>, i32 -> vector<2x256xf32>
    %c35 = arith.constant 35 : index
    %c0_40 = arith.constant 0 : index
    %183 = vector.load %arg1[%c35, %c0_40] : memref<49x256xf32, #tpu.memory_space<vmem>>, vector<1x256xf32>
    %184 = vector.broadcast %183 : vector<1x256xf32> to vector<2x256xf32>
    %185 = arith.mulf %182, %184 : vector<2x256xf32>
    %186 = arith.addf %181, %185 : vector<2x256xf32>
    %c226_i32 = arith.constant 226 : i32
    %187 = tpu.dynamic_rotate %6 by %c226_i32 dim 1 : vector<2x256xf32>, i32 -> vector<2x256xf32>
    %c36 = arith.constant 36 : index
    %c0_41 = arith.constant 0 : index
    %188 = vector.load %arg1[%c36, %c0_41] : memref<49x256xf32, #tpu.memory_space<vmem>>, vector<1x256xf32>
    %189 = vector.broadcast %188 : vector<1x256xf32> to vector<2x256xf32>
    %190 = arith.mulf %187, %189 : vector<2x256xf32>
    %191 = arith.addf %186, %190 : vector<2x256xf32>
    %c225_i32 = arith.constant 225 : i32
    %192 = tpu.dynamic_rotate %6 by %c225_i32 dim 1 : vector<2x256xf32>, i32 -> vector<2x256xf32>
    %c37 = arith.constant 37 : index
    %c0_42 = arith.constant 0 : index
    %193 = vector.load %arg1[%c37, %c0_42] : memref<49x256xf32, #tpu.memory_space<vmem>>, vector<1x256xf32>
    %194 = vector.broadcast %193 : vector<1x256xf32> to vector<2x256xf32>
    %195 = arith.mulf %192, %194 : vector<2x256xf32>
    %196 = arith.addf %191, %195 : vector<2x256xf32>
    %c224_i32 = arith.constant 224 : i32
    %197 = tpu.dynamic_rotate %6 by %c224_i32 dim 1 : vector<2x256xf32>, i32 -> vector<2x256xf32>
    %c38 = arith.constant 38 : index
    %c0_43 = arith.constant 0 : index
    %198 = vector.load %arg1[%c38, %c0_43] : memref<49x256xf32, #tpu.memory_space<vmem>>, vector<1x256xf32>
    %199 = vector.broadcast %198 : vector<1x256xf32> to vector<2x256xf32>
    %200 = arith.mulf %197, %199 : vector<2x256xf32>
    %201 = arith.addf %196, %200 : vector<2x256xf32>
    %c223_i32 = arith.constant 223 : i32
    %202 = tpu.dynamic_rotate %6 by %c223_i32 dim 1 : vector<2x256xf32>, i32 -> vector<2x256xf32>
    %c39 = arith.constant 39 : index
    %c0_44 = arith.constant 0 : index
    %203 = vector.load %arg1[%c39, %c0_44] : memref<49x256xf32, #tpu.memory_space<vmem>>, vector<1x256xf32>
    %204 = vector.broadcast %203 : vector<1x256xf32> to vector<2x256xf32>
    %205 = arith.mulf %202, %204 : vector<2x256xf32>
    %206 = arith.addf %201, %205 : vector<2x256xf32>
    %c222_i32 = arith.constant 222 : i32
    %207 = tpu.dynamic_rotate %6 by %c222_i32 dim 1 : vector<2x256xf32>, i32 -> vector<2x256xf32>
    %c40 = arith.constant 40 : index
    %c0_45 = arith.constant 0 : index
    %208 = vector.load %arg1[%c40, %c0_45] : memref<49x256xf32, #tpu.memory_space<vmem>>, vector<1x256xf32>
    %209 = vector.broadcast %208 : vector<1x256xf32> to vector<2x256xf32>
    %210 = arith.mulf %207, %209 : vector<2x256xf32>
    %211 = arith.addf %206, %210 : vector<2x256xf32>
    %c221_i32 = arith.constant 221 : i32
    %212 = tpu.dynamic_rotate %6 by %c221_i32 dim 1 : vector<2x256xf32>, i32 -> vector<2x256xf32>
    %c41 = arith.constant 41 : index
    %c0_46 = arith.constant 0 : index
    %213 = vector.load %arg1[%c41, %c0_46] : memref<49x256xf32, #tpu.memory_space<vmem>>, vector<1x256xf32>
    %214 = vector.broadcast %213 : vector<1x256xf32> to vector<2x256xf32>
    %215 = arith.mulf %212, %214 : vector<2x256xf32>
    %216 = arith.addf %211, %215 : vector<2x256xf32>
    %c211_i32 = arith.constant 211 : i32
    %217 = tpu.dynamic_rotate %6 by %c211_i32 dim 1 : vector<2x256xf32>, i32 -> vector<2x256xf32>
    %c42 = arith.constant 42 : index
    %c0_47 = arith.constant 0 : index
    %218 = vector.load %arg1[%c42, %c0_47] : memref<49x256xf32, #tpu.memory_space<vmem>>, vector<1x256xf32>
    %219 = vector.broadcast %218 : vector<1x256xf32> to vector<2x256xf32>
    %220 = arith.mulf %217, %219 : vector<2x256xf32>
    %221 = arith.addf %216, %220 : vector<2x256xf32>
    %c210_i32 = arith.constant 210 : i32
    %222 = tpu.dynamic_rotate %6 by %c210_i32 dim 1 : vector<2x256xf32>, i32 -> vector<2x256xf32>
    %c43 = arith.constant 43 : index
    %c0_48 = arith.constant 0 : index
    %223 = vector.load %arg1[%c43, %c0_48] : memref<49x256xf32, #tpu.memory_space<vmem>>, vector<1x256xf32>
    %224 = vector.broadcast %223 : vector<1x256xf32> to vector<2x256xf32>
    %225 = arith.mulf %222, %224 : vector<2x256xf32>
    %226 = arith.addf %221, %225 : vector<2x256xf32>
    %c209_i32 = arith.constant 209 : i32
    %227 = tpu.dynamic_rotate %6 by %c209_i32 dim 1 : vector<2x256xf32>, i32 -> vector<2x256xf32>
    %c44 = arith.constant 44 : index
    %c0_49 = arith.constant 0 : index
    %228 = vector.load %arg1[%c44, %c0_49] : memref<49x256xf32, #tpu.memory_space<vmem>>, vector<1x256xf32>
    %229 = vector.broadcast %228 : vector<1x256xf32> to vector<2x256xf32>
    %230 = arith.mulf %227, %229 : vector<2x256xf32>
    %231 = arith.addf %226, %230 : vector<2x256xf32>
    %c208_i32 = arith.constant 208 : i32
    %232 = tpu.dynamic_rotate %6 by %c208_i32 dim 1 : vector<2x256xf32>, i32 -> vector<2x256xf32>
    %c45 = arith.constant 45 : index
    %c0_50 = arith.constant 0 : index
    %233 = vector.load %arg1[%c45, %c0_50] : memref<49x256xf32, #tpu.memory_space<vmem>>, vector<1x256xf32>
    %234 = vector.broadcast %233 : vector<1x256xf32> to vector<2x256xf32>
    %235 = arith.mulf %232, %234 : vector<2x256xf32>
    %236 = arith.addf %231, %235 : vector<2x256xf32>
    %c207_i32 = arith.constant 207 : i32
    %237 = tpu.dynamic_rotate %6 by %c207_i32 dim 1 : vector<2x256xf32>, i32 -> vector<2x256xf32>
    %c46 = arith.constant 46 : index
    %c0_51 = arith.constant 0 : index
    %238 = vector.load %arg1[%c46, %c0_51] : memref<49x256xf32, #tpu.memory_space<vmem>>, vector<1x256xf32>
    %239 = vector.broadcast %238 : vector<1x256xf32> to vector<2x256xf32>
    %240 = arith.mulf %237, %239 : vector<2x256xf32>
    %241 = arith.addf %236, %240 : vector<2x256xf32>
    %c206_i32 = arith.constant 206 : i32
    %242 = tpu.dynamic_rotate %6 by %c206_i32 dim 1 : vector<2x256xf32>, i32 -> vector<2x256xf32>
    %c47 = arith.constant 47 : index
    %c0_52 = arith.constant 0 : index
    %243 = vector.load %arg1[%c47, %c0_52] : memref<49x256xf32, #tpu.memory_space<vmem>>, vector<1x256xf32>
    %244 = vector.broadcast %243 : vector<1x256xf32> to vector<2x256xf32>
    %245 = arith.mulf %242, %244 : vector<2x256xf32>
    %246 = arith.addf %241, %245 : vector<2x256xf32>
    %c205_i32 = arith.constant 205 : i32
    %247 = tpu.dynamic_rotate %6 by %c205_i32 dim 1 : vector<2x256xf32>, i32 -> vector<2x256xf32>
    %c48 = arith.constant 48 : index
    %c0_53 = arith.constant 0 : index
    %248 = vector.load %arg1[%c48, %c0_53] : memref<49x256xf32, #tpu.memory_space<vmem>>, vector<1x256xf32>
    %249 = vector.broadcast %248 : vector<1x256xf32> to vector<2x256xf32>
    %250 = arith.mulf %247, %249 : vector<2x256xf32>
    %251 = arith.addf %246, %250 : vector<2x256xf32>
    %c0_54 = arith.constant 0 : index
    %c0_55 = arith.constant 0 : index
    %252 = vector.load %arg3[%c0_54, %c0_55] : memref<2x256xf32, #tpu.memory_space<vmem>>, vector<2x256xf32>
    tpu.vector_store %arg3[%c0_54, %c0_55], %251 {strides = array<i32>} : memref<2x256xf32, #tpu.memory_space<vmem>>, vector<2x256xf32>,
    return
  }
  func.func @transform_0(%arg0: i32) -> (i32, i32) {
    %c0_i32 = arith.constant 0 : i32
    %c0_i32_0 = arith.constant 0 : i32
    %c0_i32_1 = arith.constant 0 : i32
    return %c0_i32, %c0_i32_0 : i32, i32
  }
  func.func @transform_1(%arg0: i32) -> (i32, i32) {
    %c0_i32 = arith.constant 0 : i32
    %c0_i32_0 = arith.constant 0 : i32
    return %arg0, %c0_i32 : i32, i32
  }
  func.func @transform_2(%arg0: i32) -> (i32, i32) {
    %c0_i32 = arith.constant 0 : i32
    %c0_i32_0 = arith.constant 0 : i32
    return %arg0, %c0_i32 : i32, i32
  }
}

</mosaic_0001>

<llo_original>
// kernel: tpu_custom_call.1
$region0: #{tpu_custom_call.1}
  #allocation0 [shape = 'u32[]', space=smem, size = 0x4, offset = 0x4, fixed_abs, tag = 'smem constant byte address 0x4 - core index']
  #allocation1 [shape = 'u32[72,128]{1,0:T(1,128)}', space=vmem, size = 0x9000, scoped, tag = 'internal scratch']
  %s0 = inlined_call_operand.hbm [shape: f32[49,256], index: 0, kind: input, shape index: {}]
  %s1 = inlined_call_operand.hbm [shape: f32[2,1024], index: 1, kind: input, shape index: {}]
  %s2 = inlined_call_operand.hbm [shape: f32[2,256], index: 2, kind: output, shape index: {}]
  %s3 = sld [smem:[#allocation0]]
  $region26: #{tpu_custom_call.1} parent=0
    _
  %s5 = ssub.s32 1, %s3
  %s6 = scalar_select 0, %s5, %s3
  $region1: #{tpu_custom_call.1} parent=0
    #allocation2 [shape = 'u8[57344]{0}', space=vmem, size = 0xe000, scoped, tag = 'input window, operand 0, single buffered']
    #allocation3 [shape = 's32[1]{0}', space=sflag, size = 0x4, scoped, tag = 'scoped memory for tpu_custom_call.1']
    #allocation4 [shape = 's32[1]{0}', space=sflag, size = 0x4, scoped, tag = 'scoped memory for tpu_custom_call.1']
    #allocation5 [shape = 'u8[8192]{0}', space=vmem, size = 0x2000, scoped, tag = 'input window, operand 1, single buffered']
    #allocation6 [shape = 's32[1]{0}', space=sflag, size = 0x4, scoped, tag = 'scoped memory for tpu_custom_call.1']
    #allocation7 [shape = 'u8[2048]{0}', space=vmem, size = 0x800, scoped, tag = 'output window, operand 0, single buffered']
    %7 = vsyncpa [#allocation3], 0
    %8 = vsyncpa [#allocation6], 0
    %9 = vsyncpa [#allocation4], 0
    // Predicated region
    $region2: #{tpu_custom_call.1} parent=1 // pred_check
      _
    $region3: #{tpu_custom_call.1} parent=1 // pred_check_branch
      %11 = sbr.rel (0) target = $region5
    $region4: #{tpu_custom_call.1} parent=1 // pred_region
      %13 = vsyncadd [#allocation3], 0
      %s14 = sshll.u32 %s0, 4
      %s15 = int_to_ptr.hbm [resolvable:$true] %s14
      %s16 = sshll.u32 [#allocation2], 4
      %s17 = int_to_ptr.vmem [resolvable:$true] %s16
      %22 = dma.hbm_to_vmem [thread:$0]  %s15, 1792, %s17, [#allocation3], 256, 256, 16
    $region5: #{tpu_custom_call.1} parent=1 // pred_fallthru
      _
    // Predicated region
    $region6: #{tpu_custom_call.1} parent=1 // pred_check
      _
    $region7: #{tpu_custom_call.1} parent=1 // pred_check_branch
      %24 = sbr.rel (0) target = $region9
    $region8: #{tpu_custom_call.1} parent=1 // pred_region
      %26 = vsyncadd [#allocation6], 0
      %s28 = sshll.u32 %s1, 4
      %s29 = int_to_ptr.hbm [resolvable:$true] %s28
      %s30 = sshll.u32 [#allocation5], 4
      %s31 = int_to_ptr.vmem [resolvable:$true] %s30
      %33 = dma.hbm_to_vmem [thread:$0]  %s29, 256, %s31, [#allocation6]
    $region9: #{tpu_custom_call.1} parent=1 // pred_fallthru
      _
    // Predicated region
    $region10: #{tpu_custom_call.1} parent=1 // pred_check
      _
    $region11: #{tpu_custom_call.1} parent=1 // pred_check_branch
      %35 = sbr.rel (0) target = $region13
    $region12: #{tpu_custom_call.1} parent=1 // pred_region
      %37 = dma.done [#allocation3], 1792
    $region13: #{tpu_custom_call.1} parent=1 // pred_fallthru
      _
    // Predicated region
    $region14: #{tpu_custom_call.1} parent=1 // pred_check
      _
    $region15: #{tpu_custom_call.1} parent=1 // pred_check_branch
      %39 = sbr.rel (0) target = $region17
    $region16: #{tpu_custom_call.1} parent=1 // pred_region
      %41 = dma.done [#allocation6], 256
    $region17: #{tpu_custom_call.1} parent=1 // pred_fallthru
      _
    %v42 = vld [vmem:[#allocation5] sm:$0xf]
    %v43 = vld [vmem:[#allocation5 + $0x4] sm:$0xf]
    %v44 = vmax.f32 %v42, %v43
    %v45 = vld [vmem:[#allocation5 + $0x8] sm:$0xf]
    %v46 = vmax.f32 %v44, %v45
    %v47 = vld [vmem:[#allocation5 + $0xc] sm:$0xf]
    %v48 = vmax.f32 %v46, %v47
    %50 = vst [vmem:[#allocation1] ss:$4 sm:$0xff] %v48
    %v51 = vld.sshfl [vmem:[#allocation1] sm:$0xff pattern:$0x73625140]
    %v52 = vld.sshfl [vmem:[#allocation1 + $0x8] sm:$0xff pattern:$0x73625140]
    %55 = vrot.lane.b32.xlu0 %v51, 51
    %v56 = vpop.permute.xlu0 %55
    %57 = vrot.lane.b32.xlu0 %v52, 51
    %v58 = vpop.permute.xlu0 %57
    %v59 = vlaneseq
    %v60 = vand.u32 %v59, 127
    %vm61 = vcmp.lt.s32.totalorder %v60, 51
    %v62 = vsel %vm61, %v56, %v58
    %v63 = vsel %vm61, %v58, %v56
    %v64 = vld [vmem:[#allocation2] ss:$8 sm:$0x3]
    %v66 = vperm.slane %v64, 0
    %v67 = vperm.slane %v64, 1
    %v70 = vmul.f32 %v63, %v66
    %v71 = vmul.f32 %v62, %v67
    %v72 = vadd.f32 %v70, 0.0
    %v73 = vadd.f32 %v71, 0.0
    %74 = vst [vmem:[#allocation1] ss:$4 sm:$0xff] %v48
    %v75 = vld.sshfl [vmem:[#allocation1] sm:$0xff pattern:$0x73625140]
    %v76 = vld.sshfl [vmem:[#allocation1 + $0x8] sm:$0xff pattern:$0x73625140]
    %79 = vrot.lane.b32.xlu0 %v75, 50
    %v80 = vpop.permute.xlu0 %79
    %81 = vrot.lane.b32.xlu0 %v76, 50
    %v82 = vpop.permute.xlu0 %81
    %vm83 = vcmp.lt.s32.totalorder %v60, 50
    %v84 = vsel %vm83, %v80, %v82
    %v85 = vsel %vm83, %v82, %v80
    %s86 = scalar_lea.vmem [#allocation2], 1
    %v87 = vld [vmem:[%s86] ss:$8 sm:$0x3]
    %v89 = vperm.slane %v87, 0
    %v90 = vperm.slane %v87, 1
    %v93 = vmul.f32 %v85, %v89
    %v94 = vmul.f32 %v84, %v90
    %v95 = vadd.f32 %v72, %v93
    %v96 = vadd.f32 %v73, %v94
    %97 = vst [vmem:[#allocation1] ss:$4 sm:$0xff] %v48
    %v98 = vld.sshfl [vmem:[#allocation1] sm:$0xff pattern:$0x73625140]
    %v99 = vld.sshfl [vmem:[#allocation1 + $0x8] sm:$0xff pattern:$0x73625140]
    %102 = vrot.lane.b32.xlu0 %v98, 49
    %v103 = vpop.permute.xlu0 %102
    %104 = vrot.lane.b32.xlu0 %v99, 49
    %v105 = vpop.permute.xlu0 %104
    %vm106 = vcmp.lt.s32.totalorder %v60, 49
    %v107 = vsel %vm106, %v103, %v105
    %v108 = vsel %vm106, %v105, %v103
    %s109 = scalar_lea.vmem [#allocation2], 2
    %v110 = vld [vmem:[%s109] ss:$8 sm:$0x3]
    %v112 = vperm.slane %v110, 0
    %v113 = vperm.slane %v110, 1
    %v116 = vmul.f32 %v108, %v112
    %v117 = vmul.f32 %v107, %v113
    %v118 = vadd.f32 %v95, %v116
    %v119 = vadd.f32 %v96, %v117
    %120 = vst [vmem:[#allocation1] ss:$4 sm:$0xff] %v48
    %v121 = vld.sshfl [vmem:[#allocation1] sm:$0xff pattern:$0x73625140]
    %v122 = vld.sshfl [vmem:[#allocation1 + $0x8] sm:$0xff pattern:$0x73625140]
    %125 = vrot.lane.b32.xlu0 %v121, 48
    %v126 = vpop.permute.xlu0 %125
    %127 = vrot.lane.b32.xlu0 %v122, 48
    %v128 = vpop.permute.xlu0 %127
    %vm129 = vcmp.lt.s32.totalorder %v60, 48
    %v130 = vsel %vm129, %v126, %v128
    %v131 = vsel %vm129, %v128, %v126
    %s132 = scalar_lea.vmem [#allocation2], 3
    %v133 = vld [vmem:[%s132] ss:$8 sm:$0x3]
    %v135 = vperm.slane %v133, 0
    %v136 = vperm.slane %v133, 1
    %v139 = vmul.f32 %v131, %v135
    %v140 = vmul.f32 %v130, %v136
    %v141 = vadd.f32 %v118, %v139
    %v142 = vadd.f32 %v119, %v140
    %143 = vst [vmem:[#allocation1] ss:$4 sm:$0xff] %v48
    %v144 = vld.sshfl [vmem:[#allocation1] sm:$0xff pattern:$0x73625140]
    %v145 = vld.sshfl [vmem:[#allocation1 + $0x8] sm:$0xff pattern:$0x73625140]
    %148 = vrot.lane.b32.xlu0 %v144, 47
    %v149 = vpop.permute.xlu0 %148
    %150 = vrot.lane.b32.xlu0 %v145, 47
    %v151 = vpop.permute.xlu0 %150
    %vm152 = vcmp.lt.s32.totalorder %v60, 47
    %v153 = vsel %vm152, %v149, %v151
    %v154 = vsel %vm152, %v151, %v149
    %s155 = scalar_lea.vmem [#allocation2], 4
    %v156 = vld [vmem:[%s155] ss:$8 sm:$0x3]
    %v158 = vperm.slane %v156, 0
    %v159 = vperm.slane %v156, 1
    %v162 = vmul.f32 %v154, %v158
    %v163 = vmul.f32 %v153, %v159
    %v164 = vadd.f32 %v141, %v162
    %v165 = vadd.f32 %v142, %v163
    %166 = vst [vmem:[#allocation1] ss:$4 sm:$0xff] %v48
    %v167 = vld.sshfl [vmem:[#allocation1] sm:$0xff pattern:$0x73625140]
    %v168 = vld.sshfl [vmem:[#allocation1 + $0x8] sm:$0xff pattern:$0x73625140]
    %171 = vrot.lane.b32.xlu0 %v167, 46
    %v172 = vpop.permute.xlu0 %171
    %173 = vrot.lane.b32.xlu0 %v168, 46
    %v174 = vpop.permute.xlu0 %173
    %vm175 = vcmp.lt.s32.totalorder %v60, 46
    %v176 = vsel %vm175, %v172, %v174
    %v177 = vsel %vm175, %v174, %v172
    %s178 = scalar_lea.vmem [#allocation2], 5
    %v179 = vld [vmem:[%s178] ss:$8 sm:$0x3]
    %v181 = vperm.slane %v179, 0
    %v182 = vperm.slane %v179, 1
    %v185 = vmul.f32 %v177, %v181
    %v186 = vmul.f32 %v176, %v182
    %v187 = vadd.f32 %v164, %v185
    %v188 = vadd.f32 %v165, %v186
    %189 = vst [vmem:[#allocation1] ss:$4 sm:$0xff] %v48
    %v190 = vld.sshfl [vmem:[#allocation1] sm:$0xff pattern:$0x73625140]
    %v191 = vld.sshfl [vmem:[#allocation1 + $0x8] sm:$0xff pattern:$0x73625140]
    %194 = vrot.lane.b32.xlu0 %v190, 45
    %v195 = vpop.permute.xlu0 %194
    %196 = vrot.lane.b32.xlu0 %v191, 45
    %v197 = vpop.permute.xlu0 %196
    %vm198 = vcmp.lt.s32.totalorder %v60, 45
    %v199 = vsel %vm198, %v195, %v197
    %v200 = vsel %vm198, %v197, %v195
    %s201 = scalar_lea.vmem [#allocation2], 6
    %v202 = vld [vmem:[%s201] ss:$8 sm:$0x3]
    %v204 = vperm.slane %v202, 0
    %v205 = vperm.slane %v202, 1
    %v208 = vmul.f32 %v200, %v204
    %v209 = vmul.f32 %v199, %v205
    %v210 = vadd.f32 %v187, %v208
    %v211 = vadd.f32 %v188, %v209
    %212 = vst [vmem:[#allocation1] ss:$4 sm:$0xff] %v48
    %v213 = vld.sshfl [vmem:[#allocation1] sm:$0xff pattern:$0x73625140]
    %v214 = vld.sshfl [vmem:[#allocation1 + $0x8] sm:$0xff pattern:$0x73625140]
    %217 = vrot.lane.b32.xlu0 %v213, 35
    %v218 = vpop.permute.xlu0 %217
    %219 = vrot.lane.b32.xlu0 %v214, 35
    %v220 = vpop.permute.xlu0 %219
    %vm221 = vcmp.lt.s32.totalorder %v60, 35
    %v222 = vsel %vm221, %v218, %v220
    %v223 = vsel %vm221, %v220, %v218
    %s224 = scalar_lea.vmem [#allocation2], 7
    %v225 = vld [vmem:[%s224] ss:$8 sm:$0x3]
    %v227 = vperm.slane %v225, 0
    %v228 = vperm.slane %v225, 1
    %v231 = vmul.f32 %v223, %v227
    %v232 = vmul.f32 %v222, %v228
    %v233 = vadd.f32 %v210, %v231
    %v234 = vadd.f32 %v211, %v232
    %235 = vst [vmem:[#allocation1] ss:$4 sm:$0xff] %v48
    %v236 = vld.sshfl [vmem:[#allocation1] sm:$0xff pattern:$0x73625140]
    %v237 = vld.sshfl [vmem:[#allocation1 + $0x8] sm:$0xff pattern:$0x73625140]
    %240 = vrot.lane.b32.xlu0 %v236, 34
    %v241 = vpop.permute.xlu0 %240
    %242 = vrot.lane.b32.xlu0 %v237, 34
    %v243 = vpop.permute.xlu0 %242
    %vm244 = vcmp.lt.s32.totalorder %v60, 34
    %v245 = vsel %vm244, %v241, %v243
    %v246 = vsel %vm244, %v243, %v241
    %s247 = scalar_lea.vmem [#allocation2], 16
    %v248 = vld [vmem:[%s247] ss:$8 sm:$0x3]
    %v250 = vperm.slane %v248, 0
    %v251 = vperm.slane %v248, 1
    %v254 = vmul.f32 %v246, %v250
    %v255 = vmul.f32 %v245, %v251
    %v256 = vadd.f32 %v233, %v254
    %v257 = vadd.f32 %v234, %v255
    %258 = vst [vmem:[#allocation1] ss:$4 sm:$0xff] %v48
    %v259 = vld.sshfl [vmem:[#allocation1] sm:$0xff pattern:$0x73625140]
    %v260 = vld.sshfl [vmem:[#allocation1 + $0x8] sm:$0xff pattern:$0x73625140]
    %263 = vrot.lane.b32.xlu0 %v259, 33
    %v264 = vpop.permute.xlu0 %263
    %265 = vrot.lane.b32.xlu0 %v260, 33
    %v266 = vpop.permute.xlu0 %265
    %vm267 = vcmp.lt.s32.totalorder %v60, 33
    %v268 = vsel %vm267, %v264, %v266
    %v269 = vsel %vm267, %v266, %v264
    %s270 = scalar_lea.vmem [#allocation2], 17
    %v271 = vld [vmem:[%s270] ss:$8 sm:$0x3]
    %v273 = vperm.slane %v271, 0
    %v274 = vperm.slane %v271, 1
    %v277 = vmul.f32 %v269, %v273
    %v278 = vmul.f32 %v268, %v274
    %v279 = vadd.f32 %v256, %v277
    %v280 = vadd.f32 %v257, %v278
    %281 = vst [vmem:[#allocation1] ss:$4 sm:$0xff] %v48
    %v282 = vld.sshfl [vmem:[#allocation1] sm:$0xff pattern:$0x73625140]
    %v283 = vld.sshfl [vmem:[#allocation1 + $0x8] sm:$0xff pattern:$0x73625140]
    %286 = vrot.lane.b32.xlu0 %v282, 32
    %v287 = vpop.permute.xlu0 %286
    %288 = vrot.lane.b32.xlu0 %v283, 32
    %v289 = vpop.permute.xlu0 %288
    %vm290 = vcmp.lt.s32.totalorder %v60, 32
    %v291 = vsel %vm290, %v287, %v289
    %v292 = vsel %vm290, %v289, %v287
    %s293 = scalar_lea.vmem [#allocation2], 18
    %v294 = vld [vmem:[%s293] ss:$8 sm:$0x3]
    %v296 = vperm.slane %v294, 0
    %v297 = vperm.slane %v294, 1
    %v300 = vmul.f32 %v292, %v296
    %v301 = vmul.f32 %v291, %v297
    %v302 = vadd.f32 %v279, %v300
    %v303 = vadd.f32 %v280, %v301
    %304 = vst [vmem:[#allocation1] ss:$4 sm:$0xff] %v48
    %v305 = vld.sshfl [vmem:[#allocation1] sm:$0xff pattern:$0x73625140]
    %v306 = vld.sshfl [vmem:[#allocation1 + $0x8] sm:$0xff pattern:$0x73625140]
    %309 = vrot.lane.b32.xlu0 %v305, 31
    %v310 = vpop.permute.xlu0 %309
    %311 = vrot.lane.b32.xlu0 %v306, 31
    %v312 = vpop.permute.xlu0 %311
    %vm313 = vcmp.lt.s32.totalorder %v60, 31
    %v314 = vsel %vm313, %v310, %v312
    %v315 = vsel %vm313, %v312, %v310
    %s316 = scalar_lea.vmem [#allocation2], 19
    %v317 = vld [vmem:[%s316] ss:$8 sm:$0x3]
    %v319 = vperm.slane %v317, 0
    %v320 = vperm.slane %v317, 1
    %v323 = vmul.f32 %v315, %v319
    %v324 = vmul.f32 %v314, %v320
    %v325 = vadd.f32 %v302, %v323
    %v326 = vadd.f32 %v303, %v324
    %327 = vst [vmem:[#allocation1] ss:$4 sm:$0xff] %v48
    %v328 = vld.sshfl [vmem:[#allocation1] sm:$0xff pattern:$0x73625140]
    %v329 = vld.sshfl [vmem:[#allocation1 + $0x8] sm:$0xff pattern:$0x73625140]
    %332 = vrot.lane.b32.xlu0 %v328, 30
    %v333 = vpop.permute.xlu0 %332
    %334 = vrot.lane.b32.xlu0 %v329, 30
    %v335 = vpop.permute.xlu0 %334
    %vm336 = vcmp.lt.s32.totalorder %v60, 30
    %v337 = vsel %vm336, %v333, %v335
    %v338 = vsel %vm336, %v335, %v333
    %s339 = scalar_lea.vmem [#allocation2], 20
    %v340 = vld [vmem:[%s339] ss:$8 sm:$0x3]
    %v342 = vperm.slane %v340, 0
    %v343 = vperm.slane %v340, 1
    %v346 = vmul.f32 %v338, %v342
    %v347 = vmul.f32 %v337, %v343
    %v348 = vadd.f32 %v325, %v346
    %v349 = vadd.f32 %v326, %v347
    %350 = vst [vmem:[#allocation1] ss:$4 sm:$0xff] %v48
    %v351 = vld.sshfl [vmem:[#allocation1] sm:$0xff pattern:$0x73625140]
    %v352 = vld.sshfl [vmem:[#allocation1 + $0x8] sm:$0xff pattern:$0x73625140]
    %355 = vrot.lane.b32.xlu0 %v351, 29
    %v356 = vpop.permute.xlu0 %355
    %357 = vrot.lane.b32.xlu0 %v352, 29
    %v358 = vpop.permute.xlu0 %357
    %vm359 = vcmp.lt.s32.totalorder %v60, 29
    %v360 = vsel %vm359, %v356, %v358
    %v361 = vsel %vm359, %v358, %v356
    %s362 = scalar_lea.vmem [#allocation2], 21
    %v363 = vld [vmem:[%s362] ss:$8 sm:$0x3]
    %v365 = vperm.slane %v363, 0
    %v366 = vperm.slane %v363, 1
    %v369 = vmul.f32 %v361, %v365
    %v370 = vmul.f32 %v360, %v366
    %v371 = vadd.f32 %v348, %v369
    %v372 = vadd.f32 %v349, %v370
    %373 = vst [vmem:[#allocation1] ss:$4 sm:$0xff] %v48
    %v374 = vld.sshfl [vmem:[#allocation1] sm:$0xff pattern:$0x73625140]
    %v375 = vld.sshfl [vmem:[#allocation1 + $0x8] sm:$0xff pattern:$0x73625140]
    %378 = vrot.lane.b32.xlu0 %v374, 19
    %v379 = vpop.permute.xlu0 %378
    %380 = vrot.lane.b32.xlu0 %v375, 19
    %v381 = vpop.permute.xlu0 %380
    %vm382 = vcmp.lt.s32.totalorder %v60, 19
    %v383 = vsel %vm382, %v379, %v381
    %v384 = vsel %vm382, %v381, %v379
    %s385 = scalar_lea.vmem [#allocation2], 22
    %v386 = vld [vmem:[%s385] ss:$8 sm:$0x3]
    %v388 = vperm.slane %v386, 0
    %v389 = vperm.slane %v386, 1
    %v392 = vmul.f32 %v384, %v388
    %v393 = vmul.f32 %v383, %v389
    %v394 = vadd.f32 %v371, %v392
    %v395 = vadd.f32 %v372, %v393
    %396 = vst [vmem:[#allocation1] ss:$4 sm:$0xff] %v48
    %v397 = vld.sshfl [vmem:[#allocation1] sm:$0xff pattern:$0x73625140]
    %v398 = vld.sshfl [vmem:[#allocation1 + $0x8] sm:$0xff pattern:$0x73625140]
    %401 = vrot.lane.b32.xlu0 %v397, 18
    %v402 = vpop.permute.xlu0 %401
    %403 = vrot.lane.b32.xlu0 %v398, 18
    %v404 = vpop.permute.xlu0 %403
    %vm405 = vcmp.lt.s32.totalorder %v60, 18
    %v406 = vsel %vm405, %v402, %v404
    %v407 = vsel %vm405, %v404, %v402
    %s408 = scalar_lea.vmem [#allocation2], 23
    %v409 = vld [vmem:[%s408] ss:$8 sm:$0x3]
    %v411 = vperm.slane %v409, 0
    %v412 = vperm.slane %v409, 1
    %v415 = vmul.f32 %v407, %v411
    %v416 = vmul.f32 %v406, %v412
    %v417 = vadd.f32 %v394, %v415
    %v418 = vadd.f32 %v395, %v416
    %419 = vst [vmem:[#allocation1] ss:$4 sm:$0xff] %v48
    %v420 = vld.sshfl [vmem:[#allocation1] sm:$0xff pattern:$0x73625140]
    %v421 = vld.sshfl [vmem:[#allocation1 + $0x8] sm:$0xff pattern:$0x73625140]
    %424 = vrot.lane.b32.xlu0 %v420, 17
    %v425 = vpop.permute.xlu0 %424
    %426 = vrot.lane.b32.xlu0 %v421, 17
    %v427 = vpop.permute.xlu0 %426
    %vm428 = vcmp.lt.s32.totalorder %v60, 17
    %v429 = vsel %vm428, %v425, %v427
    %v430 = vsel %vm428, %v427, %v425
    %s431 = scalar_lea.vmem [#allocation2], 32
    %v432 = vld [vmem:[%s431] ss:$8 sm:$0x3]
    %v434 = vperm.slane %v432, 0
    %v435 = vperm.slane %v432, 1
    %v438 = vmul.f32 %v430, %v434
    %v439 = vmul.f32 %v429, %v435
    %v440 = vadd.f32 %v417, %v438
    %v441 = vadd.f32 %v418, %v439
    %442 = vst [vmem:[#allocation1] ss:$4 sm:$0xff] %v48
    %v443 = vld.sshfl [vmem:[#allocation1] sm:$0xff pattern:$0x73625140]
    %v444 = vld.sshfl [vmem:[#allocation1 + $0x8] sm:$0xff pattern:$0x73625140]
    %447 = vrot.lane.b32.xlu0 %v443, 16
    %v448 = vpop.permute.xlu0 %447
    %449 = vrot.lane.b32.xlu0 %v444, 16
    %v450 = vpop.permute.xlu0 %449
    %vm451 = vcmp.lt.s32.totalorder %v60, 16
    %v452 = vsel %vm451, %v448, %v450
    %v453 = vsel %vm451, %v450, %v448
    %s454 = scalar_lea.vmem [#allocation2], 33
    %v455 = vld [vmem:[%s454] ss:$8 sm:$0x3]
    %v457 = vperm.slane %v455, 0
    %v458 = vperm.slane %v455, 1
    %v461 = vmul.f32 %v453, %v457
    %v462 = vmul.f32 %v452, %v458
    %v463 = vadd.f32 %v440, %v461
    %v464 = vadd.f32 %v441, %v462
    %465 = vst [vmem:[#allocation1] ss:$4 sm:$0xff] %v48
    %v466 = vld.sshfl [vmem:[#allocation1] sm:$0xff pattern:$0x73625140]
    %v467 = vld.sshfl [vmem:[#allocation1 + $0x8] sm:$0xff pattern:$0x73625140]
    %470 = vrot.lane.b32.xlu0 %v466, 15
    %v471 = vpop.permute.xlu0 %470
    %472 = vrot.lane.b32.xlu0 %v467, 15
    %v473 = vpop.permute.xlu0 %472
    %vm474 = vcmp.lt.s32.totalorder %v60, 15
    %v475 = vsel %vm474, %v471, %v473
    %v476 = vsel %vm474, %v473, %v471
    %s477 = scalar_lea.vmem [#allocation2], 34
    %v478 = vld [vmem:[%s477] ss:$8 sm:$0x3]
    %v480 = vperm.slane %v478, 0
    %v481 = vperm.slane %v478, 1
    %v484 = vmul.f32 %v476, %v480
    %v485 = vmul.f32 %v475, %v481
    %v486 = vadd.f32 %v463, %v484
    %v487 = vadd.f32 %v464, %v485
    %488 = vst [vmem:[#allocation1] ss:$4 sm:$0xff] %v48
    %v489 = vld.sshfl [vmem:[#allocation1] sm:$0xff pattern:$0x73625140]
    %v490 = vld.sshfl [vmem:[#allocation1 + $0x8] sm:$0xff pattern:$0x73625140]
    %493 = vrot.lane.b32.xlu0 %v489, 14
    %v494 = vpop.permute.xlu0 %493
    %495 = vrot.lane.b32.xlu0 %v490, 14
    %v496 = vpop.permute.xlu0 %495
    %vm497 = vcmp.lt.s32.totalorder %v60, 14
    %v498 = vsel %vm497, %v494, %v496
    %v499 = vsel %vm497, %v496, %v494
    %s500 = scalar_lea.vmem [#allocation2], 35
    %v501 = vld [vmem:[%s500] ss:$8 sm:$0x3]
    %v503 = vperm.slane %v501, 0
    %v504 = vperm.slane %v501, 1
    %v507 = vmul.f32 %v499, %v503
    %v508 = vmul.f32 %v498, %v504
    %v509 = vadd.f32 %v486, %v507
    %v510 = vadd.f32 %v487, %v508
    %511 = vst [vmem:[#allocation1] ss:$4 sm:$0xff] %v48
    %v512 = vld.sshfl [vmem:[#allocation1] sm:$0xff pattern:$0x73625140]
    %v513 = vld.sshfl [vmem:[#allocation1 + $0x8] sm:$0xff pattern:$0x73625140]
    %516 = vrot.lane.b32.xlu0 %v512, 13
    %v517 = vpop.permute.xlu0 %516
    %518 = vrot.lane.b32.xlu0 %v513, 13
    %v519 = vpop.permute.xlu0 %518
    %vm520 = vcmp.lt.s32.totalorder %v60, 13
    %v521 = vsel %vm520, %v517, %v519
    %v522 = vsel %vm520, %v519, %v517
    %s523 = scalar_lea.vmem [#allocation2], 36
    %v524 = vld [vmem:[%s523] ss:$8 sm:$0x3]
    %v526 = vperm.slane %v524, 0
    %v527 = vperm.slane %v524, 1
    %v530 = vmul.f32 %v522, %v526
    %v531 = vmul.f32 %v521, %v527
    %v532 = vadd.f32 %v509, %v530
    %v533 = vadd.f32 %v510, %v531
    %534 = vst [vmem:[#allocation1] ss:$4 sm:$0xff] %v48
    %v535 = vld.sshfl [vmem:[#allocation1] sm:$0xff pattern:$0x73625140]
    %v536 = vld.sshfl [vmem:[#allocation1 + $0x8] sm:$0xff pattern:$0x73625140]
    %539 = vrot.lane.b32.xlu0 %v535, 3
    %v540 = vpop.permute.xlu0 %539
    %541 = vrot.lane.b32.xlu0 %v536, 3
    %v542 = vpop.permute.xlu0 %541
    %vm543 = vcmp.lt.s32.totalorder %v60, 3
    %v544 = vsel %vm543, %v540, %v542
    %v545 = vsel %vm543, %v542, %v540
    %s546 = scalar_lea.vmem [#allocation2], 37
    %v547 = vld [vmem:[%s546] ss:$8 sm:$0x3]
    %v549 = vperm.slane %v547, 0
    %v550 = vperm.slane %v547, 1
    %v553 = vmul.f32 %v545, %v549
    %v554 = vmul.f32 %v544, %v550
    %v555 = vadd.f32 %v532, %v553
    %v556 = vadd.f32 %v533, %v554
    %557 = vst [vmem:[#allocation1] ss:$4 sm:$0xff] %v48
    %v558 = vld.sshfl [vmem:[#allocation1] sm:$0xff pattern:$0x73625140]
    %v559 = vld.sshfl [vmem:[#allocation1 + $0x8] sm:$0xff pattern:$0x73625140]
    %562 = vrot.lane.b32.xlu0 %v558, 2
    %v563 = vpop.permute.xlu0 %562
    %564 = vrot.lane.b32.xlu0 %v559, 2
    %v565 = vpop.permute.xlu0 %564
    %vm566 = vcmp.lt.s32.totalorder %v60, 2
    %v567 = vsel %vm566, %v563, %v565
    %v568 = vsel %vm566, %v565, %v563
    %s569 = scalar_lea.vmem [#allocation2], 38
    %v570 = vld [vmem:[%s569] ss:$8 sm:$0x3]
    %v572 = vperm.slane %v570, 0
    %v573 = vperm.slane %v570, 1
    %v576 = vmul.f32 %v568, %v572
    %v577 = vmul.f32 %v567, %v573
    %v578 = vadd.f32 %v555, %v576
    %v579 = vadd.f32 %v556, %v577
    %580 = vst [vmem:[#allocation1] ss:$4 sm:$0xff] %v48
    %v581 = vld.sshfl [vmem:[#allocation1] sm:$0xff pattern:$0x73625140]
    %v582 = vld.sshfl [vmem:[#allocation1 + $0x8] sm:$0xff pattern:$0x73625140]
    %585 = vrot.lane.b32.xlu0 %v581, 1
    %v586 = vpop.permute.xlu0 %585
    %587 = vrot.lane.b32.xlu0 %v582, 1
    %v588 = vpop.permute.xlu0 %587
    %vm589 = vcmp.lt.s32.totalorder %v60, 1
    %v590 = vsel %vm589, %v586, %v588
    %v591 = vsel %vm589, %v588, %v586
    %s592 = scalar_lea.vmem [#allocation2], 39
    %v593 = vld [vmem:[%s592] ss:$8 sm:$0x3]
    %v595 = vperm.slane %v593, 0
    %v596 = vperm.slane %v593, 1
    %v599 = vmul.f32 %v591, %v595
    %v600 = vmul.f32 %v590, %v596
    %v601 = vadd.f32 %v578, %v599
    %v602 = vadd.f32 %v579, %v600
    %s603 = scalar_lea.vmem [#allocation2], 48
    %v604 = vld [vmem:[%s603] ss:$8 sm:$0x3]
    %v606 = vperm.slane %v604, 0
    %v607 = vperm.slane %v604, 1
    %v608 = vrot.slane %v607, 6
    %vm609 = vcmask 1041408
    %v610 = vsel %vm609, %v606, %v608
    %v612 = vmul.f32 %v48, %v610
    %614 = vst [vmem:[#allocation1] ss:$4 sm:$0xff] %v612
    %v615 = vld.sshfl [vmem:[#allocation1] sm:$0xff pattern:$0x73625140]
    %v616 = vld.sshfl [vmem:[#allocation1 + $0x8] sm:$0xff pattern:$0x73625140]
    %v619 = vadd.f32 %v601, %v615
    %v620 = vadd.f32 %v602, %v616
    %621 = vst [vmem:[#allocation1] ss:$4 sm:$0xff] %v48
    %v622 = vld.sshfl [vmem:[#allocation1] sm:$0xff pattern:$0x73625140]
    %v623 = vld.sshfl [vmem:[#allocation1 + $0x8] sm:$0xff pattern:$0x73625140]
    %626 = vrot.lane.b32.xlu0 %v622, 127
    %v627 = vpop.permute.xlu0 %626
    %628 = vrot.lane.b32.xlu0 %v623, 127
    %v629 = vpop.permute.xlu0 %628
    %vm630 = vcmp.lt.s32.totalorder %v60, 127
    %v631 = vsel %vm630, %v627, %v629
    %v632 = vsel %vm630, %v629, %v627
    %s633 = scalar_lea.vmem [#allocation2], 49
    %v634 = vld [vmem:[%s633] ss:$8 sm:$0x3]
    %v636 = vperm.slane %v634, 0
    %v637 = vperm.slane %v634, 1
    %v640 = vmul.f32 %v631, %v636
    %v641 = vmul.f32 %v632, %v637
    %v642 = vadd.f32 %v619, %v640
    %v643 = vadd.f32 %v620, %v641
    %644 = vst [vmem:[#allocation1] ss:$4 sm:$0xff] %v48
    %v645 = vld.sshfl [vmem:[#allocation1] sm:$0xff pattern:$0x73625140]
    %v646 = vld.sshfl [vmem:[#allocation1 + $0x8] sm:$0xff pattern:$0x73625140]
    %649 = vrot.lane.b32.xlu0 %v645, 126
    %v650 = vpop.permute.xlu0 %649
    %651 = vrot.lane.b32.xlu0 %v646, 126
    %v652 = vpop.permute.xlu0 %651
    %vm653 = vcmp.lt.s32.totalorder %v60, 126
    %v654 = vsel %vm653, %v650, %v652
    %v655 = vsel %vm653, %v652, %v650
    %s656 = scalar_lea.vmem [#allocation2], 50
    %v657 = vld [vmem:[%s656] ss:$8 sm:$0x3]
    %v659 = vperm.slane %v657, 0
    %v660 = vperm.slane %v657, 1
    %v663 = vmul.f32 %v654, %v659
    %v664 = vmul.f32 %v655, %v660
    %v665 = vadd.f32 %v642, %v663
    %v666 = vadd.f32 %v643, %v664
    %667 = vst [vmem:[#allocation1] ss:$4 sm:$0xff] %v48
    %v668 = vld.sshfl [vmem:[#allocation1] sm:$0xff pattern:$0x73625140]
    %v669 = vld.sshfl [vmem:[#allocation1 + $0x8] sm:$0xff pattern:$0x73625140]
    %672 = vrot.lane.b32.xlu0 %v668, 125
    %v673 = vpop.permute.xlu0 %672
    %674 = vrot.lane.b32.xlu0 %v669, 125
    %v675 = vpop.permute.xlu0 %674
    %vm676 = vcmp.lt.s32.totalorder %v60, 125
    %v677 = vsel %vm676, %v673, %v675
    %v678 = vsel %vm676, %v675, %v673
    %s679 = scalar_lea.vmem [#allocation2], 51
    %v680 = vld [vmem:[%s679] ss:$8 sm:$0x3]
    %v682 = vperm.slane %v680, 0
    %v683 = vperm.slane %v680, 1
    %v686 = vmul.f32 %v677, %v682
    %v687 = vmul.f32 %v678, %v683
    %v688 = vadd.f32 %v665, %v686
    %v689 = vadd.f32 %v666, %v687
    %690 = vst [vmem:[#allocation1] ss:$4 sm:$0xff] %v48
    %v691 = vld.sshfl [vmem:[#allocation1] sm:$0xff pattern:$0x73625140]
    %v692 = vld.sshfl [vmem:[#allocation1 + $0x8] sm:$0xff pattern:$0x73625140]
    %695 = vrot.lane.b32.xlu0 %v691, 115
    %v696 = vpop.permute.xlu0 %695
    %697 = vrot.lane.b32.xlu0 %v692, 115
    %v698 = vpop.permute.xlu0 %697
    %vm699 = vcmp.lt.s32.totalorder %v60, 115
    %v700 = vsel %vm699, %v696, %v698
    %v701 = vsel %vm699, %v698, %v696
    %s702 = scalar_lea.vmem [#allocation2], 52
    %v703 = vld [vmem:[%s702] ss:$8 sm:$0x3]
    %v705 = vperm.slane %v703, 0
    %v706 = vperm.slane %v703, 1
    %v709 = vmul.f32 %v700, %v705
    %v710 = vmul.f32 %v701, %v706
    %v711 = vadd.f32 %v688, %v709
    %v712 = vadd.f32 %v689, %v710
    %713 = vst [vmem:[#allocation1] ss:$4 sm:$0xff] %v48
    %v714 = vld.sshfl [vmem:[#allocation1] sm:$0xff pattern:$0x73625140]
    %v715 = vld.sshfl [vmem:[#allocation1 + $0x8] sm:$0xff pattern:$0x73625140]
    %718 = vrot.lane.b32.xlu0 %v714, 114
    %v719 = vpop.permute.xlu0 %718
    %720 = vrot.lane.b32.xlu0 %v715, 114
    %v721 = vpop.permute.xlu0 %720
    %vm722 = vcmp.lt.s32.totalorder %v60, 114
    %v723 = vsel %vm722, %v719, %v721
    %v724 = vsel %vm722, %v721, %v719
    %s725 = scalar_lea.vmem [#allocation2], 53
    %v726 = vld [vmem:[%s725] ss:$8 sm:$0x3]
    %v728 = vperm.slane %v726, 0
    %v729 = vperm.slane %v726, 1
    %v732 = vmul.f32 %v723, %v728
    %v733 = vmul.f32 %v724, %v729
    %v734 = vadd.f32 %v711, %v732
    %v735 = vadd.f32 %v712, %v733
    %736 = vst [vmem:[#allocation1] ss:$4 sm:$0xff] %v48
    %v737 = vld.sshfl [vmem:[#allocation1] sm:$0xff pattern:$0x73625140]
    %v738 = vld.sshfl [vmem:[#allocation1 + $0x8] sm:$0xff pattern:$0x73625140]
    %741 = vrot.lane.b32.xlu0 %v737, 113
    %v742 = vpop.permute.xlu0 %741
    %743 = vrot.lane.b32.xlu0 %v738, 113
    %v744 = vpop.permute.xlu0 %743
    %vm745 = vcmp.lt.s32.totalorder %v60, 113
    %v746 = vsel %vm745, %v742, %v744
    %v747 = vsel %vm745, %v744, %v742
    %s748 = scalar_lea.vmem [#allocation2], 54
    %v749 = vld [vmem:[%s748] ss:$8 sm:$0x3]
    %v751 = vperm.slane %v749, 0
    %v752 = vperm.slane %v749, 1
    %v755 = vmul.f32 %v746, %v751
    %v756 = vmul.f32 %v747, %v752
    %v757 = vadd.f32 %v734, %v755
    %v758 = vadd.f32 %v735, %v756
    %759 = vst [vmem:[#allocation1] ss:$4 sm:$0xff] %v48
    %v760 = vld.sshfl [vmem:[#allocation1] sm:$0xff pattern:$0x73625140]
    %v761 = vld.sshfl [vmem:[#allocation1 + $0x8] sm:$0xff pattern:$0x73625140]
    %764 = vrot.lane.b32.xlu0 %v760, 112
    %v765 = vpop.permute.xlu0 %764
    %766 = vrot.lane.b32.xlu0 %v761, 112
    %v767 = vpop.permute.xlu0 %766
    %vm768 = vcmp.lt.s32.totalorder %v60, 112
    %v769 = vsel %vm768, %v765, %v767
    %v770 = vsel %vm768, %v767, %v765
    %s771 = scalar_lea.vmem [#allocation2], 55
    %v772 = vld [vmem:[%s771] ss:$8 sm:$0x3]
    %v774 = vperm.slane %v772, 0
    %v775 = vperm.slane %v772, 1
    %v778 = vmul.f32 %v769, %v774
    %v779 = vmul.f32 %v770, %v775
    %v780 = vadd.f32 %v757, %v778
    %v781 = vadd.f32 %v758, %v779
    %782 = vst [vmem:[#allocation1] ss:$4 sm:$0xff] %v48
    %v783 = vld.sshfl [vmem:[#allocation1] sm:$0xff pattern:$0x73625140]
    %v784 = vld.sshfl [vmem:[#allocation1 + $0x8] sm:$0xff pattern:$0x73625140]
    %787 = vrot.lane.b32.xlu0 %v783, 111
    %v788 = vpop.permute.xlu0 %787
    %789 = vrot.lane.b32.xlu0 %v784, 111
    %v790 = vpop.permute.xlu0 %789
    %vm791 = vcmp.lt.s32.totalorder %v60, 111
    %v792 = vsel %vm791, %v788, %v790
    %v793 = vsel %vm791, %v790, %v788
    %s794 = scalar_lea.vmem [#allocation2], 64
    %v795 = vld [vmem:[%s794] ss:$8 sm:$0x3]
    %v797 = vperm.slane %v795, 0
    %v798 = vperm.slane %v795, 1
    %v801 = vmul.f32 %v792, %v797
    %v802 = vmul.f32 %v793, %v798
    %v803 = vadd.f32 %v780, %v801
    %v804 = vadd.f32 %v781, %v802
    %805 = vst [vmem:[#allocation1] ss:$4 sm:$0xff] %v48
    %v806 = vld.sshfl [vmem:[#allocation1] sm:$0xff pattern:$0x73625140]
    %v807 = vld.sshfl [vmem:[#allocation1 + $0x8] sm:$0xff pattern:$0x73625140]
    %810 = vrot.lane.b32.xlu0 %v806, 110
    %v811 = vpop.permute.xlu0 %810
    %812 = vrot.lane.b32.xlu0 %v807, 110
    %v813 = vpop.permute.xlu0 %812
    %vm814 = vcmp.lt.s32.totalorder %v60, 110
    %v815 = vsel %vm814, %v811, %v813
    %v816 = vsel %vm814, %v813, %v811
    %s817 = scalar_lea.vmem [#allocation2], 65
    %v818 = vld [vmem:[%s817] ss:$8 sm:$0x3]
    %v820 = vperm.slane %v818, 0
    %v821 = vperm.slane %v818, 1
    %v824 = vmul.f32 %v815, %v820
    %v825 = vmul.f32 %v816, %v821
    %v826 = vadd.f32 %v803, %v824
    %v827 = vadd.f32 %v804, %v825
    %828 = vst [vmem:[#allocation1] ss:$4 sm:$0xff] %v48
    %v829 = vld.sshfl [vmem:[#allocation1] sm:$0xff pattern:$0x73625140]
    %v830 = vld.sshfl [vmem:[#allocation1 + $0x8] sm:$0xff pattern:$0x73625140]
    %833 = vrot.lane.b32.xlu0 %v829, 109
    %v834 = vpop.permute.xlu0 %833
    %835 = vrot.lane.b32.xlu0 %v830, 109
    %v836 = vpop.permute.xlu0 %835
    %vm837 = vcmp.lt.s32.totalorder %v60, 109
    %v838 = vsel %vm837, %v834, %v836
    %v839 = vsel %vm837, %v836, %v834
    %s840 = scalar_lea.vmem [#allocation2], 66
    %v841 = vld [vmem:[%s840] ss:$8 sm:$0x3]
    %v843 = vperm.slane %v841, 0
    %v844 = vperm.slane %v841, 1
    %v847 = vmul.f32 %v838, %v843
    %v848 = vmul.f32 %v839, %v844
    %v849 = vadd.f32 %v826, %v847
    %v850 = vadd.f32 %v827, %v848
    %851 = vst [vmem:[#allocation1] ss:$4 sm:$0xff] %v48
    %v852 = vld.sshfl [vmem:[#allocation1] sm:$0xff pattern:$0x73625140]
    %v853 = vld.sshfl [vmem:[#allocation1 + $0x8] sm:$0xff pattern:$0x73625140]
    %856 = vrot.lane.b32.xlu0 %v852, 99
    %v857 = vpop.permute.xlu0 %856
    %858 = vrot.lane.b32.xlu0 %v853, 99
    %v859 = vpop.permute.xlu0 %858
    %vm860 = vcmp.lt.s32.totalorder %v60, 99
    %v861 = vsel %vm860, %v857, %v859
    %v862 = vsel %vm860, %v859, %v857
    %s863 = scalar_lea.vmem [#allocation2], 67
    %v864 = vld [vmem:[%s863] ss:$8 sm:$0x3]
    %v866 = vperm.slane %v864, 0
    %v867 = vperm.slane %v864, 1
    %v870 = vmul.f32 %v861, %v866
    %v871 = vmul.f32 %v862, %v867
    %v872 = vadd.f32 %v849, %v870
    %v873 = vadd.f32 %v850, %v871
    %874 = vst [vmem:[#allocation1] ss:$4 sm:$0xff] %v48
    %v875 = vld.sshfl [vmem:[#allocation1] sm:$0xff pattern:$0x73625140]
    %v876 = vld.sshfl [vmem:[#allocation1 + $0x8] sm:$0xff pattern:$0x73625140]
    %879 = vrot.lane.b32.xlu0 %v875, 98
    %v880 = vpop.permute.xlu0 %879
    %881 = vrot.lane.b32.xlu0 %v876, 98
    %v882 = vpop.permute.xlu0 %881
    %vm883 = vcmp.lt.s32.totalorder %v60, 98
    %v884 = vsel %vm883, %v880, %v882
    %v885 = vsel %vm883, %v882, %v880
    %s886 = scalar_lea.vmem [#allocation2], 68
    %v887 = vld [vmem:[%s886] ss:$8 sm:$0x3]
    %v889 = vperm.slane %v887, 0
    %v890 = vperm.slane %v887, 1
    %v893 = vmul.f32 %v884, %v889
    %v894 = vmul.f32 %v885, %v890
    %v895 = vadd.f32 %v872, %v893
    %v896 = vadd.f32 %v873, %v894
    %897 = vst [vmem:[#allocation1] ss:$4 sm:$0xff] %v48
    %v898 = vld.sshfl [vmem:[#allocation1] sm:$0xff pattern:$0x73625140]
    %v899 = vld.sshfl [vmem:[#allocation1 + $0x8] sm:$0xff pattern:$0x73625140]
    %902 = vrot.lane.b32.xlu0 %v898, 97
    %v903 = vpop.permute.xlu0 %902
    %904 = vrot.lane.b32.xlu0 %v899, 97
    %v905 = vpop.permute.xlu0 %904
    %vm906 = vcmp.lt.s32.totalorder %v60, 97
    %v907 = vsel %vm906, %v903, %v905
    %v908 = vsel %vm906, %v905, %v903
    %s909 = scalar_lea.vmem [#allocation2], 69
    %v910 = vld [vmem:[%s909] ss:$8 sm:$0x3]
    %v912 = vperm.slane %v910, 0
    %v913 = vperm.slane %v910, 1
    %v916 = vmul.f32 %v907, %v912
    %v917 = vmul.f32 %v908, %v913
    %v918 = vadd.f32 %v895, %v916
    %v919 = vadd.f32 %v896, %v917
    %920 = vst [vmem:[#allocation1] ss:$4 sm:$0xff] %v48
    %v921 = vld.sshfl [vmem:[#allocation1] sm:$0xff pattern:$0x73625140]
    %v922 = vld.sshfl [vmem:[#allocation1 + $0x8] sm:$0xff pattern:$0x73625140]
    %925 = vrot.lane.b32.xlu0 %v921, 96
    %v926 = vpop.permute.xlu0 %925
    %927 = vrot.lane.b32.xlu0 %v922, 96
    %v928 = vpop.permute.xlu0 %927
    %vm929 = vcmp.lt.s32.totalorder %v60, 96
    %v930 = vsel %vm929, %v926, %v928
    %v931 = vsel %vm929, %v928, %v926
    %s932 = scalar_lea.vmem [#allocation2], 70
    %v933 = vld [vmem:[%s932] ss:$8 sm:$0x3]
    %v935 = vperm.slane %v933, 0
    %v936 = vperm.slane %v933, 1
    %v939 = vmul.f32 %v930, %v935
    %v940 = vmul.f32 %v931, %v936
    %v941 = vadd.f32 %v918, %v939
    %v942 = vadd.f32 %v919, %v940
    %943 = vst [vmem:[#allocation1] ss:$4 sm:$0xff] %v48
    %v944 = vld.sshfl [vmem:[#allocation1] sm:$0xff pattern:$0x73625140]
    %v945 = vld.sshfl [vmem:[#allocation1 + $0x8] sm:$0xff pattern:$0x73625140]
    %948 = vrot.lane.b32.xlu0 %v944, 95
    %v949 = vpop.permute.xlu0 %948
    %950 = vrot.lane.b32.xlu0 %v945, 95
    %v951 = vpop.permute.xlu0 %950
    %vm952 = vcmp.lt.s32.totalorder %v60, 95
    %v953 = vsel %vm952, %v949, %v951
    %v954 = vsel %vm952, %v951, %v949
    %s955 = scalar_lea.vmem [#allocation2], 71
    %v956 = vld [vmem:[%s955] ss:$8 sm:$0x3]
    %v958 = vperm.slane %v956, 0
    %v959 = vperm.slane %v956, 1
    %v962 = vmul.f32 %v953, %v958
    %v963 = vmul.f32 %v954, %v959
    %v964 = vadd.f32 %v941, %v962
    %v965 = vadd.f32 %v942, %v963
    %966 = vst [vmem:[#allocation1] ss:$4 sm:$0xff] %v48
    %v967 = vld.sshfl [vmem:[#allocation1] sm:$0xff pattern:$0x73625140]
    %v968 = vld.sshfl [vmem:[#allocation1 + $0x8] sm:$0xff pattern:$0x73625140]
    %971 = vrot.lane.b32.xlu0 %v967, 94
    %v972 = vpop.permute.xlu0 %971
    %973 = vrot.lane.b32.xlu0 %v968, 94
    %v974 = vpop.permute.xlu0 %973
    %vm975 = vcmp.lt.s32.totalorder %v60, 94
    %v976 = vsel %vm975, %v972, %v974
    %v977 = vsel %vm975, %v974, %v972
    %s978 = scalar_lea.vmem [#allocation2], 80
    %v979 = vld [vmem:[%s978] ss:$8 sm:$0x3]
    %v981 = vperm.slane %v979, 0
    %v982 = vperm.slane %v979, 1
    %v985 = vmul.f32 %v976, %v981
    %v986 = vmul.f32 %v977, %v982
    %v987 = vadd.f32 %v964, %v985
    %v988 = vadd.f32 %v965, %v986
    %989 = vst [vmem:[#allocation1] ss:$4 sm:$0xff] %v48
    %v990 = vld.sshfl [vmem:[#allocation1] sm:$0xff pattern:$0x73625140]
    %v991 = vld.sshfl [vmem:[#allocation1 + $0x8] sm:$0xff pattern:$0x73625140]
    %994 = vrot.lane.b32.xlu0 %v990, 93
    %v995 = vpop.permute.xlu0 %994
    %996 = vrot.lane.b32.xlu0 %v991, 93
    %v997 = vpop.permute.xlu0 %996
    %vm998 = vcmp.lt.s32.totalorder %v60, 93
    %v999 = vsel %vm998, %v995, %v997
    %v1000 = vsel %vm998, %v997, %v995
    %s1001 = scalar_lea.vmem [#allocation2], 81
    %v1002 = vld [vmem:[%s1001] ss:$8 sm:$0x3]
    %v1004 = vperm.slane %v1002, 0
    %v1005 = vperm.slane %v1002, 1
    %v1008 = vmul.f32 %v999, %v1004
    %v1009 = vmul.f32 %v1000, %v1005
    %v1010 = vadd.f32 %v987, %v1008
    %v1011 = vadd.f32 %v988, %v1009
    %1012 = vst [vmem:[#allocation1] ss:$4 sm:$0xff] %v48
    %v1013 = vld.sshfl [vmem:[#allocation1] sm:$0xff pattern:$0x73625140]
    %v1014 = vld.sshfl [vmem:[#allocation1 + $0x8] sm:$0xff pattern:$0x73625140]
    %1017 = vrot.lane.b32.xlu0 %v1013, 83
    %v1018 = vpop.permute.xlu0 %1017
    %1019 = vrot.lane.b32.xlu0 %v1014, 83
    %v1020 = vpop.permute.xlu0 %1019
    %vm1021 = vcmp.lt.s32.totalorder %v60, 83
    %v1022 = vsel %vm1021, %v1018, %v1020
    %v1023 = vsel %vm1021, %v1020, %v1018
    %s1024 = scalar_lea.vmem [#allocation2], 82
    %v1025 = vld [vmem:[%s1024] ss:$8 sm:$0x3]
    %v1027 = vperm.slane %v1025, 0
    %v1028 = vperm.slane %v1025, 1
    %v1031 = vmul.f32 %v1022, %v1027
    %v1032 = vmul.f32 %v1023, %v1028
    %v1033 = vadd.f32 %v1010, %v1031
    %v1034 = vadd.f32 %v1011, %v1032
    %1035 = vst [vmem:[#allocation1] ss:$4 sm:$0xff] %v48
    %v1036 = vld.sshfl [vmem:[#allocation1] sm:$0xff pattern:$0x73625140]
    %v1037 = vld.sshfl [vmem:[#allocation1 + $0x8] sm:$0xff pattern:$0x73625140]
    %1040 = vrot.lane.b32.xlu0 %v1036, 82
    %v1041 = vpop.permute.xlu0 %1040
    %1042 = vrot.lane.b32.xlu0 %v1037, 82
    %v1043 = vpop.permute.xlu0 %1042
    %vm1044 = vcmp.lt.s32.totalorder %v60, 82
    %v1045 = vsel %vm1044, %v1041, %v1043
    %v1046 = vsel %vm1044, %v1043, %v1041
    %s1047 = scalar_lea.vmem [#allocation2], 83
    %v1048 = vld [vmem:[%s1047] ss:$8 sm:$0x3]
    %v1050 = vperm.slane %v1048, 0
    %v1051 = vperm.slane %v1048, 1
    %v1054 = vmul.f32 %v1045, %v1050
    %v1055 = vmul.f32 %v1046, %v1051
    %v1056 = vadd.f32 %v1033, %v1054
    %v1057 = vadd.f32 %v1034, %v1055
    %1058 = vst [vmem:[#allocation1] ss:$4 sm:$0xff] %v48
    %v1059 = vld.sshfl [vmem:[#allocation1] sm:$0xff pattern:$0x73625140]
    %v1060 = vld.sshfl [vmem:[#allocation1 + $0x8] sm:$0xff pattern:$0x73625140]
    %1063 = vrot.lane.b32.xlu0 %v1059, 81
    %v1064 = vpop.permute.xlu0 %1063
    %1065 = vrot.lane.b32.xlu0 %v1060, 81
    %v1066 = vpop.permute.xlu0 %1065
    %vm1067 = vcmp.lt.s32.totalorder %v60, 81
    %v1068 = vsel %vm1067, %v1064, %v1066
    %v1069 = vsel %vm1067, %v1066, %v1064
    %s1070 = scalar_lea.vmem [#allocation2], 84
    %v1071 = vld [vmem:[%s1070] ss:$8 sm:$0x3]
    %v1073 = vperm.slane %v1071, 0
    %v1074 = vperm.slane %v1071, 1
    %v1077 = vmul.f32 %v1068, %v1073
    %v1078 = vmul.f32 %v1069, %v1074
    %v1079 = vadd.f32 %v1056, %v1077
    %v1080 = vadd.f32 %v1057, %v1078
    %1081 = vst [vmem:[#allocation1] ss:$4 sm:$0xff] %v48
    %v1082 = vld.sshfl [vmem:[#allocation1] sm:$0xff pattern:$0x73625140]
    %v1083 = vld.sshfl [vmem:[#allocation1 + $0x8] sm:$0xff pattern:$0x73625140]
    %1086 = vrot.lane.b32.xlu0 %v1082, 80
    %v1087 = vpop.permute.xlu0 %1086
    %1088 = vrot.lane.b32.xlu0 %v1083, 80
    %v1089 = vpop.permute.xlu0 %1088
    %vm1090 = vcmp.lt.s32.totalorder %v60, 80
    %v1091 = vsel %vm1090, %v1087, %v1089
    %v1092 = vsel %vm1090, %v1089, %v1087
    %s1093 = scalar_lea.vmem [#allocation2], 85
    %v1094 = vld [vmem:[%s1093] ss:$8 sm:$0x3]
    %v1096 = vperm.slane %v1094, 0
    %v1097 = vperm.slane %v1094, 1
    %v1100 = vmul.f32 %v1091, %v1096
    %v1101 = vmul.f32 %v1092, %v1097
    %v1102 = vadd.f32 %v1079, %v1100
    %v1103 = vadd.f32 %v1080, %v1101
    %1104 = vst [vmem:[#allocation1] ss:$4 sm:$0xff] %v48
    %v1105 = vld.sshfl [vmem:[#allocation1] sm:$0xff pattern:$0x73625140]
    %v1106 = vld.sshfl [vmem:[#allocation1 + $0x8] sm:$0xff pattern:$0x73625140]
    %1109 = vrot.lane.b32.xlu0 %v1105, 79
    %v1110 = vpop.permute.xlu0 %1109
    %1111 = vrot.lane.b32.xlu0 %v1106, 79
    %v1112 = vpop.permute.xlu0 %1111
    %vm1113 = vcmp.lt.s32.totalorder %v60, 79
    %v1114 = vsel %vm1113, %v1110, %v1112
    %v1115 = vsel %vm1113, %v1112, %v1110
    %s1116 = scalar_lea.vmem [#allocation2], 86
    %v1117 = vld [vmem:[%s1116] ss:$8 sm:$0x3]
    %v1119 = vperm.slane %v1117, 0
    %v1120 = vperm.slane %v1117, 1
    %v1123 = vmul.f32 %v1114, %v1119
    %v1124 = vmul.f32 %v1115, %v1120
    %v1125 = vadd.f32 %v1102, %v1123
    %v1126 = vadd.f32 %v1103, %v1124
    %1127 = vst [vmem:[#allocation1] ss:$4 sm:$0xff] %v48
    %v1128 = vld.sshfl [vmem:[#allocation1] sm:$0xff pattern:$0x73625140]
    %v1129 = vld.sshfl [vmem:[#allocation1 + $0x8] sm:$0xff pattern:$0x73625140]
    %1132 = vrot.lane.b32.xlu0 %v1128, 78
    %v1133 = vpop.permute.xlu0 %1132
    %1134 = vrot.lane.b32.xlu0 %v1129, 78
    %v1135 = vpop.permute.xlu0 %1134
    %vm1136 = vcmp.lt.s32.totalorder %v60, 78
    %v1137 = vsel %vm1136, %v1133, %v1135
    %v1138 = vsel %vm1136, %v1135, %v1133
    %s1139 = scalar_lea.vmem [#allocation2], 87
    %v1140 = vld [vmem:[%s1139] ss:$8 sm:$0x3]
    %v1142 = vperm.slane %v1140, 0
    %v1143 = vperm.slane %v1140, 1
    %v1146 = vmul.f32 %v1137, %v1142
    %v1147 = vmul.f32 %v1138, %v1143
    %v1148 = vadd.f32 %v1125, %v1146
    %v1149 = vadd.f32 %v1126, %v1147
    %1150 = vst [vmem:[#allocation1] ss:$4 sm:$0xff] %v48
    %v1151 = vld.sshfl [vmem:[#allocation1] sm:$0xff pattern:$0x73625140]
    %v1152 = vld.sshfl [vmem:[#allocation1 + $0x8] sm:$0xff pattern:$0x73625140]
    %1155 = vrot.lane.b32.xlu0 %v1151, 77
    %v1156 = vpop.permute.xlu0 %1155
    %1157 = vrot.lane.b32.xlu0 %v1152, 77
    %v1158 = vpop.permute.xlu0 %1157
    %vm1159 = vcmp.lt.s32.totalorder %v60, 77
    %v1160 = vsel %vm1159, %v1156, %v1158
    %v1161 = vsel %vm1159, %v1158, %v1156
    %s1162 = scalar_lea.vmem [#allocation2], 96
    %v1163 = vld [vmem:[%s1162] ss:$8 sm:$0x3]
    %v1165 = vperm.slane %v1163, 0
    %v1166 = vperm.slane %v1163, 1
    %v1169 = vmul.f32 %v1160, %v1165
    %v1170 = vmul.f32 %v1161, %v1166
    %v1171 = vadd.f32 %v1148, %v1169
    %v1172 = vadd.f32 %v1149, %v1170
    %v1175 = vrot.slane %v1172, 6
    %v1176 = vsel %vm609, %v1171, %v1175
    %1178 = vst [vmem:[#allocation7] sm:$0xf] %v1176
    // Predicated region
    $region18: #{tpu_custom_call.1} parent=1 // pred_check
      _
    $region19: #{tpu_custom_call.1} parent=1 // pred_check_branch
      %1180 = sbr.rel (0) target = $region21
    $region20: #{tpu_custom_call.1} parent=1 // pred_region
      %1182 = vsyncadd [#allocation4], 0
      %s1184 = sshll.u32 [#allocation7], 4
      %s1185 = int_to_ptr.vmem [resolvable:$true] %s1184
      %s1186 = sshll.u32 %s2, 4
      %s1187 = int_to_ptr.hbm [resolvable:$true] %s1186
      %1189 = dma.vmem_to_hbm [thread:$0]  %s1185, 64, %s1187, [#allocation4]
    $region21: #{tpu_custom_call.1} parent=1 // pred_fallthru
      _
    // Predicated region
    $region22: #{tpu_custom_call.1} parent=1 // pred_check
      _
    $region23: #{tpu_custom_call.1} parent=1 // pred_check_branch
      %1191 = sbr.rel (0) target = $region25
    $region24: #{tpu_custom_call.1} parent=1 // pred_region
      %1193 = dma.done [#allocation4], 64
    $region25: #{tpu_custom_call.1} parent=1 // pred_fallthru
      _
    %1194 = vsyncpa [#allocation3], 1
    %1195 = vsyncpa [#allocation6], 1
    %1196 = vsyncpa [#allocation4], 1

</llo_original>
